<compile_context>
chip_gen: v6e
topology: v6e:2x2x1
jax: 0.10.0
libtpu: 0.0.40
codegen_flags: <defaults>
</compile_context>

<pallas_src>
import math

import jax
import jax.numpy as jnp
from jax import lax
from jax.experimental import pallas as pl
from jax.experimental.pallas import tpu as pltpu


LANE = 128      # vreg lane count
SUBLANE = 8     # vreg sublane count (f32)


def _round_up(x, m):
    return (x + m - 1) // m * m


# ----------------------------- Pallas kernel -----------------------------

def apihelper_kernel(x_ref, oh_ref, w_ih_ref, w_hh_ref, b_ref,
                     w_out_ref, b_out_ref, mask_ref, out_ref, gx_ref, hs_ref):
    """LSTM over S steps (hoisted input projection), hole-select, linear, add-mask.

    Shapes (per grid block):
      x_ref:     (S*Bb, E)   bf16  contiguous slab, row = t*Bb + b (sqrt(E) folded into w_ih)
      oh_ref:    (Bb, S)     f32   one-hot of the hole position per row
      w_ih_ref:  (E, GP)     bf16  compact gate-packed input weights  [i|f|g|o]
      w_hh_ref:  (H, GP)     bf16  compact gate-packed recurrent weights
      b_ref:     (1, GP)     f32   b_ih + b_hh
      w_out_ref: (H, VP)     bf16  output projection (cols >= V are zero)
      b_out_ref: (1, VP)     f32
      mask_ref:  (Bb, VP)    f32   additive candidate mask (0 / -1e9)
      out_ref:   (Bb, VP)    f32   masked logits
      gx_ref:    (S*Bb, GP)  f32   VMEM scratch: hoisted input projection
      hs_ref:    (S, Bb, H)  f32   VMEM scratch: per-step hidden states
    """
    S, Bb, H = hs_ref.shape

    # Hoisted input projection: ONE bf16 MXU pass for all timesteps; bias added in f32.
    gx_ref[...] = (jnp.dot(x_ref[...], w_ih_ref[...],
                           preferred_element_type=jnp.float32) + b_ref[...])

    w_hh = w_hh_ref[...]                         # (H, GP) bf16, resident in vregs

    h = jnp.zeros((Bb, H), jnp.float32)
    c = jnp.zeros((Bb, H), jnp.float32)

    # Fully-unrolled recurrence (S is a compile-time constant).  Compact 128-lane gates:
    # one MXU column pass per step; full-vreg sigmoid/tanh (2 EUP pushes) then 32-lane slices.
    for t in range(S):
        gates = gx_ref[t * Bb:(t + 1) * Bb, :] + jnp.dot(
            h.astype(jnp.bfloat16), w_hh, preferred_element_type=jnp.float32)  # (Bb, GP) f32
        sig = jax.nn.sigmoid(gates)              # i | f | . | o lanes used
        th = jnp.tanh(gates)                     # . | . | g | . lanes used
        c = sig[:, H:2 * H] * c + sig[:, 0:H] * th[:, 2 * H:3 * H]
        h = sig[:, 3 * H:4 * H] * jnp.tanh(c)
        hs_ref[t] = h                            # store only; off the serial h->gates->h chain

    # One-time hole selection after the recurrence (off the critical chain).
    onehot = oh_ref[...]                         # (Bb, S) f32
    h_sel = onehot[:, 0:1] * hs_ref[0]
    for t in range(1, S):
        h_sel = h_sel + onehot[:, t:t + 1] * hs_ref[t]

    logits = jnp.dot(h_sel.astype(jnp.bfloat16), w_out_ref[...],
                     preferred_element_type=jnp.float32) + b_out_ref[...]       # (Bb, VP)
    out_ref[...] = logits + mask_ref[...]        # additive 0 / -1e9 candidate mask


# ------------------------- parameter prep + wrapper -----------------------

def prepare_params(w_ih, w_hh, b, w_out, b_out):
    """One-time prep: compact gate packing (4H lanes), sqrt(E) fold, bf16 MXU operands."""
    E, G = w_ih.shape            # G = 4*H
    V = w_out.shape[1]
    GP = _round_up(G, LANE)      # 4*H == 128 here -> no per-gate padding
    VP = _round_up(V, LANE)
    scale = math.sqrt(float(E))                                   # embedding * sqrt(E) fold
    w_ih_p = jnp.pad(w_ih * scale, ((0, 0), (0, GP - G))).astype(jnp.bfloat16)   # (E, GP)
    w_hh_p = jnp.pad(w_hh, ((0, 0), (0, GP - G))).astype(jnp.bfloat16)           # (H, GP)
    b_p = jnp.pad(b, ((0, 0), (0, GP - G)))                                       # (1, GP) f32
    w_out_p = jnp.pad(w_out, ((0, 0), (0, VP - V))).astype(jnp.bfloat16)          # (H, VP)
    b_out_p = jnp.pad(b_out, ((0, 0), (0, VP - V)))                               # (1, VP) f32
    return w_ih_p, w_hh_p, b_p, w_out_p, b_out_p


def apihelper_pallas(x, hole_loc, candidate_ids, params_p, V):
    """x: (B, S, E) UNscaled embeddings, hole_loc: (B,) int32, candidate_ids: (B, V)."""
    w_ih_p, w_hh_p, b_p, w_out_p, b_out_p = params_p
    B, S, E = x.shape
    H, GP = w_hh_p.shape
    VP = w_out_p.shape[1]

    # Batch block: up to 128 MXU rows per block, but keep >=2 blocks when possible so
    # both v7x TensorCores get work.  Degenerates to one 8-row block at tiny batches.
    BP0 = _round_up(B, SUBLANE)
    if BP0 <= SUBLANE:
        B_BLK = SUBLANE
    else:
        B_BLK = min(128, _round_up(pl.cdiv(BP0, 2), SUBLANE))
    BP = _round_up(BP0, B_BLK)
    nblk = BP // B_BLK

    # Contiguous per-block x slab: rows ordered (block, t, b_within_block); bf16 MXU operand.
    x_pad = jnp.pad(x, ((0, BP - B), (0, 0), (0, 0))).astype(jnp.bfloat16)   # (BP, S, E)
    x_slab = (x_pad.reshape(nblk, B_BLK, S, E)
                    .transpose(0, 2, 1, 3)
                    .reshape(nblk * S * B_BLK, E))                           # (nblk*S*B_BLK, E)

    onehot = jax.nn.one_hot(hole_loc, S, dtype=jnp.float32)                  # (B, S)
    onehot_p = jnp.pad(onehot, ((0, BP - B), (0, 0)))                        # (BP, S)
    cand_p = jnp.pad(candidate_ids, ((0, BP - B), (0, VP - V)))              # (BP, VP)
    mask_p = jnp.where(cand_p == 0, jnp.float32(-1.0e9), jnp.float32(0.0))   # additive mask

    full = lambda shape: pl.BlockSpec(shape, lambda i: (0,) * len(shape))

    out = pl.pallas_call(
        apihelper_kernel,
        out_shape=jax.ShapeDtypeStruct((BP, VP), jnp.float32),
        grid=(nblk,),
        in_specs=[
            pl.BlockSpec((S * B_BLK, E), lambda i: (i, 0)),   # x slab (contiguous per block)
            pl.BlockSpec((B_BLK, S), lambda i: (i, 0)),       # hole one-hot
            full((E, GP)),                                    # w_ih (scale folded, bf16)
            full((H, GP)),                                    # w_hh (bf16)
            full((1, GP)),                                    # bias (b_ih + b_hh, f32)
            full((H, VP)),                                    # w_out (bf16)
            full((1, VP)),                                    # b_out (f32)
            pl.BlockSpec((B_BLK, VP), lambda i: (i, 0)),      # additive candidate mask
        ],
        out_specs=pl.BlockSpec((B_BLK, VP), lambda i: (i, 0)),
        scratch_shapes=[pltpu.VMEM((S * B_BLK, GP), jnp.float32),
                        pltpu.VMEM((S, B_BLK, H), jnp.float32)],
        compiler_params=pltpu.CompilerParams(
            dimension_semantics=("parallel",)),   # batch grid -> both TCs on v7x
    )(x_slab, onehot_p, w_ih_p, w_hh_p, b_p, w_out_p, b_out_p, mask_p)

    return out[:B, :V]


# --------------------------- references ---------------------------

def apihelper_ref_f32(x_scaled, hole_loc, w_ih, w_hh, b, w_out, b_out, candidate_ids):
    """Full-f32 reference of the original module's forward."""
    B, S, E = x_scaled.shape
    H = w_hh.shape[0]
    hp = lax.Precision.HIGHEST

    def step(carry, x_t):
        h, c = carry
        gates = jnp.dot(x_t, w_ih, precision=hp) + jnp.dot(h, w_hh, precision=hp) + b
        i_g = jax.nn.sigmoid(gates[:, 0 * H:1 * H])
        f_g = jax.nn.sigmoid(gates[:, 1 * H:2 * H])
        g_g = jnp.tanh(gates[:, 2 * H:3 * H])
        o_g = jax.nn.sigmoid(gates[:, 3 * H:4 * H])
        c = f_g * c + i_g * g_g
        h = o_g * jnp.tanh(c)
        return (h, c), h

    zeros = jnp.zeros((B, H), jnp.float32)
    _, hs = lax.scan(step, (zeros, zeros), jnp.swapaxes(x_scaled, 0, 1))   # (S, B, H)
    h_sel = jnp.swapaxes(hs, 0, 1)[jnp.arange(B), hole_loc]
    logits = jnp.dot(h_sel, w_out, precision=hp) + b_out
    return jnp.where(candidate_ids == 0, jnp.float32(-1.0e9), logits)


def apihelper_ref_matched(x, hole_loc, params_p, candidate_ids, V):
    """Pure-JAX replica of the kernel numerics (bf16 MXU operands, f32 accumulate/gates)."""
    w_ih_p, w_hh_p, b_p, w_out_p, b_out_p = params_p
    B, S, E = x.shape
    H = w_hh_p.shape[0]
    xb = x.astype(jnp.bfloat16)
    gx = jnp.einsum('bse,eg->bsg', xb, w_ih_p,
                    preferred_element_type=jnp.float32) + b_p            # (B, S, GP)

    def step(carry, gx_t):
        h, c = carry
        gates = gx_t + jnp.dot(h.astype(jnp.bfloat16), w_hh_p,
                               preferred_element_type=jnp.float32)
        sig = jax.nn.sigmoid(gates)
        th = jnp.tanh(gates)
        c = sig[:, H:2 * H] * c + sig[:, 0:H] * th[:, 2 * H:3 * H]
        h = sig[:, 3 * H:4 * H] * jnp.tanh(c)
        return (h, c), h

    zeros = jnp.zeros((B, H), jnp.float32)
    _, hs = lax.scan(step, (zeros, zeros), jnp.swapaxes(gx, 0, 1))        # (S, B, H)
    h_sel = jnp.swapaxes(hs, 0, 1)[jnp.arange(B), hole_loc]
    logits = jnp.dot(h_sel.astype(jnp.bfloat16), w_out_p,
                     preferred_element_type=jnp.float32) + b_out_p
    logits = logits[:, :V]
    return jnp.where(candidate_ids == 0, jnp.float32(-1.0e9), logits)


# --------------------------------- main ----------------------------------

if __name__ == "__main__":
    # Model hyper-parameters (small, consistent with the module's __init__).
    API_VOCAB = 64          # api_vocab_size (output / candidate width V)
    API_DIM = 16            # api_embed_dim
    CLASS_VOCAB = 16        # class_vocab_size
    CLASS_DIM = 16          # class_embed_dim
    HIDDEN = 32             # hidden_size (4*H == 128 -> natural lane-dense gate layout)
    HOLE_ID = 2
    B, S = 2, 8
    E = API_DIM + CLASS_DIM

    key = jax.random.PRNGKey(0)
    ks = jax.random.split(key, 10)

    # ---- deterministic parameter init (padding_idx=0 rows zeroed) ----
    api_emb_w = 0.1 * jax.random.normal(ks[0], (API_VOCAB, API_DIM), jnp.float32)
    api_emb_w = api_emb_w.at[0].set(0.0)
    class_emb_w = 0.1 * jax.random.normal(ks[1], (CLASS_VOCAB, CLASS_DIM), jnp.float32)
    class_emb_w = class_emb_w.at[0].set(0.0)

    w_ih = 0.1 * jax.random.normal(ks[2], (E, 4 * HIDDEN), jnp.float32)
    w_hh = 0.1 * jax.random.normal(ks[3], (HIDDEN, 4 * HIDDEN), jnp.float32)
    b_lstm = 0.1 * jax.random.normal(ks[4], (1, 4 * HIDDEN), jnp.float32)  # b_ih + b_hh
    w_out = 0.1 * jax.random.normal(ks[5], (HIDDEN, API_VOCAB), jnp.float32)
    b_out = 0.1 * jax.random.normal(ks[6], (1, API_VOCAB), jnp.float32)

    # ---- deterministic example inputs (exactly one hole per row, as the module assumes) ----
    api_ids = jax.random.randint(ks[7], (B, S), 3, API_VOCAB, jnp.int32)
    hole_positions = jnp.array([1, 5], jnp.int32)
    api_ids = api_ids.at[jnp.arange(B), hole_positions].set(HOLE_ID)
    class_ids = jax.random.randint(ks[8], (B, S), 0, CLASS_VOCAB, jnp.int32)
    candidate_ids = jax.random.randint(ks[9], (B, API_VOCAB), 0, 3, jnp.int32)

    # ---- glue: embedding lookup + hole location (plain JAX; sqrt(E) folded into w_ih) ----
    # hole_loc reproduces `(api_ids == hole_id).nonzero()[:, 1]` under the module's
    # assumption of exactly one hole per row (argmax picks position 0 if no hole).
    hole_loc = jnp.argmax(api_ids == HOLE_ID, axis=1).astype(jnp.int32)    # (B,)
    class_embed = jnp.take(class_emb_w, class_ids, axis=0)                 # (B, S, CLASS_DIM)
    api_embed = jnp.take(api_emb_w, api_ids, axis=0)                       # (B, S, API_DIM)
    x = jnp.concatenate([class_embed, api_embed], axis=-1)                 # (B, S, E) unscaled
    # dropout=0.0 -> identity; omitted.

    params_p = prepare_params(w_ih, w_hh, b_lstm, w_out, b_out)
    out = apihelper_pallas(x, hole_loc, candidate_ids, params_p, API_VOCAB)
    out = jax.block_until_ready(out)
    assert out.shape == (B, API_VOCAB)

    # Structural check: pure-JAX replica with the same bf16 matmul operands (tight tolerance).
    ref_m = apihelper_ref_matched(x, hole_loc, params_p, candidate_ids, API_VOCAB)
    assert jnp.allclose(out, ref_m, atol=1e-3, rtol=1e-3)

    # Semantic check vs. the original module's full-f32 math (tolerance covers bf16 operands).
    x_scaled = x * math.sqrt(float(E))
    ref_f = apihelper_ref_f32(x_scaled, hole_loc, w_ih, w_hh, b_lstm, w_out, b_out,
                              candidate_ids)
    assert jnp.allclose(out, ref_f, atol=2e-2, rtol=2e-2)

    print("KERNEL_OK")
</pallas_src>

<mosaic_0001>
module attributes {stable_mosaic.version = 11 : i64} {
  func.func @apihelper_kernel(%arg0: i32, %arg1: memref<64x32xbf16, #tpu.memory_space<vmem>>, %arg2: memref<8x8xf32, #tpu.memory_space<vmem>>, %arg3: memref<32x128xbf16, #tpu.memory_space<vmem>>, %arg4: memref<32x128xbf16, #tpu.memory_space<vmem>>, %arg5: memref<1x128xf32, #tpu.memory_space<vmem>>, %arg6: memref<32x128xbf16, #tpu.memory_space<vmem>>, %arg7: memref<1x128xf32, #tpu.memory_space<vmem>>, %arg8: memref<8x128xf32, #tpu.memory_space<vmem>>, %arg9: memref<8x128xf32, #tpu.memory_space<vmem>>, %arg10: memref<64x128xf32, #tpu.memory_space<vmem>>, %arg11: memref<8x8x32xf32, #tpu.memory_space<vmem>>) attributes {dimension_semantics = [#tpu.dimension_semantics<parallel>], iteration_bounds = array<i64: 1>, scalar_prefetch = 0 : i64, scratch_operands = 2 : i64, tpu.core_type = #tpu.core_type<tc>, window_params = [{transform_indices = @transform_0, window_bounds = array<i64: 64, 32>}, {transform_indices = @transform_1, window_bounds = array<i64: 8, 8>}, {pipeline_mode = #tpu.pipeline_mode<synchronous>, transform_indices = @transform_2, window_bounds = array<i64: 32, 128>}, {pipeline_mode = #tpu.pipeline_mode<synchronous>, transform_indices = @transform_3, window_bounds = array<i64: 32, 128>}, {pipeline_mode = #tpu.pipeline_mode<synchronous>, transform_indices = @transform_4, window_bounds = array<i64: 1, 128>}, {pipeline_mode = #tpu.pipeline_mode<synchronous>, transform_indices = @transform_5, window_bounds = array<i64: 32, 128>}, {pipeline_mode = #tpu.pipeline_mode<synchronous>, transform_indices = @transform_6, window_bounds = array<i64: 1, 128>}, {transform_indices = @transform_7, window_bounds = array<i64: 8, 128>}, {transform_indices = @transform_8, window_bounds = array<i64: 8, 128>}]} {
    %c0 = arith.constant 0 : index
    %c0_0 = arith.constant 0 : index
    %0 = vector.load %arg1[%c0, %c0_0] : memref<64x32xbf16, #tpu.memory_space<vmem>>, vector<64x32xbf16>
    %c0_1 = arith.constant 0 : index
    %c0_2 = arith.constant 0 : index
    %1 = vector.load %arg3[%c0_1, %c0_2] : memref<32x128xbf16, #tpu.memory_space<vmem>>, vector<32x128xbf16>
    %cst = arith.constant dense<0.000000e+00> : vector<64x128xf32>
    %2 = tpu.matmul %0, %1, %cst {dimension_numbers = #tpu.dot_dimension_numbers<[1], [0], [0], [1], [0, 0, 1, 1], [], []>} : vector<64x32xbf16>, vector<32x128xbf16>, vector<64x128xf32> -> vector<64x128xf32>
    %c0_3 = arith.constant 0 : index
    %c0_4 = arith.constant 0 : index
    %3 = vector.load %arg5[%c0_3, %c0_4] : memref<1x128xf32, #tpu.memory_space<vmem>>, vector<1x128xf32>
    %4 = vector.broadcast %3 : vector<1x128xf32> to vector<64x128xf32>
    %5 = arith.addf %2, %4 : vector<64x128xf32>
    %c0_5 = arith.constant 0 : index
    %c0_6 = arith.constant 0 : index
    %6 = vector.load %arg10[%c0_5, %c0_6] : memref<64x128xf32, #tpu.memory_space<vmem>>, vector<64x128xf32>
    tpu.vector_store %arg10[%c0_5, %c0_6], %5 {strides = array<i32>} : memref<64x128xf32, #tpu.memory_space<vmem>>, vector<64x128xf32>,
    %c0_7 = arith.constant 0 : index
    %c0_8 = arith.constant 0 : index
    %7 = vector.load %arg4[%c0_7, %c0_8] : memref<32x128xbf16, #tpu.memory_space<vmem>>, vector<32x128xbf16>
    %cst_9 = arith.constant 0.000000e+00 : f32
    %8 = vector.broadcast %cst_9 : f32 to vector<8x32xf32>
    %cst_10 = arith.constant 0.000000e+00 : f32
    %9 = vector.broadcast %cst_10 : f32 to vector<8x32xf32>
    %c0_11 = arith.constant 0 : index
    %c0_12 = arith.constant 0 : index
    %10 = vector.load %arg10[%c0_11, %c0_12] : memref<64x128xf32, #tpu.memory_space<vmem>>, vector<8x128xf32>
    %11 = arith.truncf %8 : vector<8x32xf32> to vector<8x32xbf16>
    %cst_13 = arith.constant dense<0.000000e+00> : vector<8x128xf32>
    %12 = tpu.matmul %11, %7, %cst_13 {dimension_numbers = #tpu.dot_dimension_numbers<[1], [0], [0], [1], [0, 0, 1, 1], [], []>} : vector<8x32xbf16>, vector<32x128xbf16>, vector<8x128xf32> -> vector<8x128xf32>
    %13 = arith.addf %10, %12 : vector<8x128xf32>
    %14 = arith.negf %13 : vector<8x128xf32>
    %15 = math.exp %14 : vector<8x128xf32>
    %cst_14 = arith.constant 1.000000e+00 : f32
    %16 = vector.broadcast %cst_14 : f32 to vector<8x128xf32>
    %17 = arith.addf %16, %15 : vector<8x128xf32>
    %18 = arith.divf %16, %17 : vector<8x128xf32>
    %19 = math.tanh %13 : vector<8x128xf32>
    %20 = vector.extract_strided_slice %18 {offsets = [0, 32], sizes = [8, 32], strides = [1, 1]} : vector<8x128xf32> to vector<8x32xf32>
    %21 = arith.mulf %20, %9 : vector<8x32xf32>
    %22 = vector.extract_strided_slice %18 {offsets = [0, 0], sizes = [8, 32], strides = [1, 1]} : vector<8x128xf32> to vector<8x32xf32>
    %23 = vector.extract_strided_slice %19 {offsets = [0, 64], sizes = [8, 32], strides = [1, 1]} : vector<8x128xf32> to vector<8x32xf32>
    %24 = arith.mulf %22, %23 : vector<8x32xf32>
    %25 = arith.addf %21, %24 : vector<8x32xf32>
    %26 = vector.extract_strided_slice %18 {offsets = [0, 96], sizes = [8, 32], strides = [1, 1]} : vector<8x128xf32> to vector<8x32xf32>
    %27 = math.tanh %25 : vector<8x32xf32>
    %28 = arith.mulf %26, %27 : vector<8x32xf32>
    %c0_15 = arith.constant 0 : index
    %c0_16 = arith.constant 0 : index
    %c0_17 = arith.constant 0 : index
    %29 = vector.load %arg11[%c0_15, %c0_16, %c0_17] : memref<8x8x32xf32, #tpu.memory_space<vmem>>, vector<1x8x32xf32>
    %30 = vector.shape_cast %29 : vector<1x8x32xf32> to vector<8x32xf32>
    %31 = vector.shape_cast %28 : vector<8x32xf32> to vector<1x8x32xf32>
    tpu.vector_store %arg11[%c0_15, %c0_16, %c0_17], %31 {strides = array<i32>} : memref<8x8x32xf32, #tpu.memory_space<vmem>>, vector<1x8x32xf32>,
    %c8 = arith.constant 8 : index
    %c0_18 = arith.constant 0 : index
    %32 = vector.load %arg10[%c8, %c0_18] : memref<64x128xf32, #tpu.memory_space<vmem>>, vector<8x128xf32>
    %33 = arith.truncf %28 : vector<8x32xf32> to vector<8x32xbf16>
    %cst_19 = arith.constant dense<0.000000e+00> : vector<8x128xf32>
    %34 = tpu.matmul %33, %7, %cst_19 {dimension_numbers = #tpu.dot_dimension_numbers<[1], [0], [0], [1], [0, 0, 1, 1], [], []>} : vector<8x32xbf16>, vector<32x128xbf16>, vector<8x128xf32> -> vector<8x128xf32>
    %35 = arith.addf %32, %34 : vector<8x128xf32>
    %36 = arith.negf %35 : vector<8x128xf32>
    %37 = math.exp %36 : vector<8x128xf32>
    %cst_20 = arith.constant 1.000000e+00 : f32
    %38 = vector.broadcast %cst_20 : f32 to vector<8x128xf32>
    %39 = arith.addf %38, %37 : vector<8x128xf32>
    %40 = arith.divf %38, %39 : vector<8x128xf32>
    %41 = math.tanh %35 : vector<8x128xf32>
    %42 = vector.extract_strided_slice %40 {offsets = [0, 32], sizes = [8, 32], strides = [1, 1]} : vector<8x128xf32> to vector<8x32xf32>
    %43 = arith.mulf %42, %25 : vector<8x32xf32>
    %44 = vector.extract_strided_slice %40 {offsets = [0, 0], sizes = [8, 32], strides = [1, 1]} : vector<8x128xf32> to vector<8x32xf32>
    %45 = vector.extract_strided_slice %41 {offsets = [0, 64], sizes = [8, 32], strides = [1, 1]} : vector<8x128xf32> to vector<8x32xf32>
    %46 = arith.mulf %44, %45 : vector<8x32xf32>
    %47 = arith.addf %43, %46 : vector<8x32xf32>
    %48 = vector.extract_strided_slice %40 {offsets = [0, 96], sizes = [8, 32], strides = [1, 1]} : vector<8x128xf32> to vector<8x32xf32>
    %49 = math.tanh %47 : vector<8x32xf32>
    %50 = arith.mulf %48, %49 : vector<8x32xf32>
    %c1 = arith.constant 1 : index
    %c0_21 = arith.constant 0 : index
    %c0_22 = arith.constant 0 : index
    %51 = vector.load %arg11[%c1, %c0_21, %c0_22] : memref<8x8x32xf32, #tpu.memory_space<vmem>>, vector<1x8x32xf32>
    %52 = vector.shape_cast %51 : vector<1x8x32xf32> to vector<8x32xf32>
    %53 = vector.shape_cast %50 : vector<8x32xf32> to vector<1x8x32xf32>
    tpu.vector_store %arg11[%c1, %c0_21, %c0_22], %53 {strides = array<i32>} : memref<8x8x32xf32, #tpu.memory_space<vmem>>, vector<1x8x32xf32>,
    %c16 = arith.constant 16 : index
    %c0_23 = arith.constant 0 : index
    %54 = vector.load %arg10[%c16, %c0_23] : memref<64x128xf32, #tpu.memory_space<vmem>>, vector<8x128xf32>
    %55 = arith.truncf %50 : vector<8x32xf32> to vector<8x32xbf16>
    %cst_24 = arith.constant dense<0.000000e+00> : vector<8x128xf32>
    %56 = tpu.matmul %55, %7, %cst_24 {dimension_numbers = #tpu.dot_dimension_numbers<[1], [0], [0], [1], [0, 0, 1, 1], [], []>} : vector<8x32xbf16>, vector<32x128xbf16>, vector<8x128xf32> -> vector<8x128xf32>
    %57 = arith.addf %54, %56 : vector<8x128xf32>
    %58 = arith.negf %57 : vector<8x128xf32>
    %59 = math.exp %58 : vector<8x128xf32>
    %cst_25 = arith.constant 1.000000e+00 : f32
    %60 = vector.broadcast %cst_25 : f32 to vector<8x128xf32>
    %61 = arith.addf %60, %59 : vector<8x128xf32>
    %62 = arith.divf %60, %61 : vector<8x128xf32>
    %63 = math.tanh %57 : vector<8x128xf32>
    %64 = vector.extract_strided_slice %62 {offsets = [0, 32], sizes = [8, 32], strides = [1, 1]} : vector<8x128xf32> to vector<8x32xf32>
    %65 = arith.mulf %64, %47 : vector<8x32xf32>
    %66 = vector.extract_strided_slice %62 {offsets = [0, 0], sizes = [8, 32], strides = [1, 1]} : vector<8x128xf32> to vector<8x32xf32>
    %67 = vector.extract_strided_slice %63 {offsets = [0, 64], sizes = [8, 32], strides = [1, 1]} : vector<8x128xf32> to vector<8x32xf32>
    %68 = arith.mulf %66, %67 : vector<8x32xf32>
    %69 = arith.addf %65, %68 : vector<8x32xf32>
    %70 = vector.extract_strided_slice %62 {offsets = [0, 96], sizes = [8, 32], strides = [1, 1]} : vector<8x128xf32> to vector<8x32xf32>
    %71 = math.tanh %69 : vector<8x32xf32>
    %72 = arith.mulf %70, %71 : vector<8x32xf32>
    %c2 = arith.constant 2 : index
    %c0_26 = arith.constant 0 : index
    %c0_27 = arith.constant 0 : index
    %73 = vector.load %arg11[%c2, %c0_26, %c0_27] : memref<8x8x32xf32, #tpu.memory_space<vmem>>, vector<1x8x32xf32>
    %74 = vector.shape_cast %73 : vector<1x8x32xf32> to vector<8x32xf32>
    %75 = vector.shape_cast %72 : vector<8x32xf32> to vector<1x8x32xf32>
    tpu.vector_store %arg11[%c2, %c0_26, %c0_27], %75 {strides = array<i32>} : memref<8x8x32xf32, #tpu.memory_space<vmem>>, vector<1x8x32xf32>,
    %c24 = arith.constant 24 : index
    %c0_28 = arith.constant 0 : index
    %76 = vector.load %arg10[%c24, %c0_28] : memref<64x128xf32, #tpu.memory_space<vmem>>, vector<8x128xf32>
    %77 = arith.truncf %72 : vector<8x32xf32> to vector<8x32xbf16>
    %cst_29 = arith.constant dense<0.000000e+00> : vector<8x128xf32>
    %78 = tpu.matmul %77, %7, %cst_29 {dimension_numbers = #tpu.dot_dimension_numbers<[1], [0], [0], [1], [0, 0, 1, 1], [], []>} : vector<8x32xbf16>, vector<32x128xbf16>, vector<8x128xf32> -> vector<8x128xf32>
    %79 = arith.addf %76, %78 : vector<8x128xf32>
    %80 = arith.negf %79 : vector<8x128xf32>
    %81 = math.exp %80 : vector<8x128xf32>
    %cst_30 = arith.constant 1.000000e+00 : f32
    %82 = vector.broadcast %cst_30 : f32 to vector<8x128xf32>
    %83 = arith.addf %82, %81 : vector<8x128xf32>
    %84 = arith.divf %82, %83 : vector<8x128xf32>
    %85 = math.tanh %79 : vector<8x128xf32>
    %86 = vector.extract_strided_slice %84 {offsets = [0, 32], sizes = [8, 32], strides = [1, 1]} : vector<8x128xf32> to vector<8x32xf32>
    %87 = arith.mulf %86, %69 : vector<8x32xf32>
    %88 = vector.extract_strided_slice %84 {offsets = [0, 0], sizes = [8, 32], strides = [1, 1]} : vector<8x128xf32> to vector<8x32xf32>
    %89 = vector.extract_strided_slice %85 {offsets = [0, 64], sizes = [8, 32], strides = [1, 1]} : vector<8x128xf32> to vector<8x32xf32>
    %90 = arith.mulf %88, %89 : vector<8x32xf32>
    %91 = arith.addf %87, %90 : vector<8x32xf32>
    %92 = vector.extract_strided_slice %84 {offsets = [0, 96], sizes = [8, 32], strides = [1, 1]} : vector<8x128xf32> to vector<8x32xf32>
    %93 = math.tanh %91 : vector<8x32xf32>
    %94 = arith.mulf %92, %93 : vector<8x32xf32>
    %c3 = arith.constant 3 : index
    %c0_31 = arith.constant 0 : index
    %c0_32 = arith.constant 0 : index
    %95 = vector.load %arg11[%c3, %c0_31, %c0_32] : memref<8x8x32xf32, #tpu.memory_space<vmem>>, vector<1x8x32xf32>
    %96 = vector.shape_cast %95 : vector<1x8x32xf32> to vector<8x32xf32>
    %97 = vector.shape_cast %94 : vector<8x32xf32> to vector<1x8x32xf32>
    tpu.vector_store %arg11[%c3, %c0_31, %c0_32], %97 {strides = array<i32>} : memref<8x8x32xf32, #tpu.memory_space<vmem>>, vector<1x8x32xf32>,
    %c32 = arith.constant 32 : index
    %c0_33 = arith.constant 0 : index
    %98 = vector.load %arg10[%c32, %c0_33] : memref<64x128xf32, #tpu.memory_space<vmem>>, vector<8x128xf32>
    %99 = arith.truncf %94 : vector<8x32xf32> to vector<8x32xbf16>
    %cst_34 = arith.constant dense<0.000000e+00> : vector<8x128xf32>
    %100 = tpu.matmul %99, %7, %cst_34 {dimension_numbers = #tpu.dot_dimension_numbers<[1], [0], [0], [1], [0, 0, 1, 1], [], []>} : vector<8x32xbf16>, vector<32x128xbf16>, vector<8x128xf32> -> vector<8x128xf32>
    %101 = arith.addf %98, %100 : vector<8x128xf32>
    %102 = arith.negf %101 : vector<8x128xf32>
    %103 = math.exp %102 : vector<8x128xf32>
    %cst_35 = arith.constant 1.000000e+00 : f32
    %104 = vector.broadcast %cst_35 : f32 to vector<8x128xf32>
    %105 = arith.addf %104, %103 : vector<8x128xf32>
    %106 = arith.divf %104, %105 : vector<8x128xf32>
    %107 = math.tanh %101 : vector<8x128xf32>
    %108 = vector.extract_strided_slice %106 {offsets = [0, 32], sizes = [8, 32], strides = [1, 1]} : vector<8x128xf32> to vector<8x32xf32>
    %109 = arith.mulf %108, %91 : vector<8x32xf32>
    %110 = vector.extract_strided_slice %106 {offsets = [0, 0], sizes = [8, 32], strides = [1, 1]} : vector<8x128xf32> to vector<8x32xf32>
    %111 = vector.extract_strided_slice %107 {offsets = [0, 64], sizes = [8, 32], strides = [1, 1]} : vector<8x128xf32> to vector<8x32xf32>
    %112 = arith.mulf %110, %111 : vector<8x32xf32>
    %113 = arith.addf %109, %112 : vector<8x32xf32>
    %114 = vector.extract_strided_slice %106 {offsets = [0, 96], sizes = [8, 32], strides = [1, 1]} : vector<8x128xf32> to vector<8x32xf32>
    %115 = math.tanh %113 : vector<8x32xf32>
    %116 = arith.mulf %114, %115 : vector<8x32xf32>
    %c4 = arith.constant 4 : index
    %c0_36 = arith.constant 0 : index
    %c0_37 = arith.constant 0 : index
    %117 = vector.load %arg11[%c4, %c0_36, %c0_37] : memref<8x8x32xf32, #tpu.memory_space<vmem>>, vector<1x8x32xf32>
    %118 = vector.shape_cast %117 : vector<1x8x32xf32> to vector<8x32xf32>
    %119 = vector.shape_cast %116 : vector<8x32xf32> to vector<1x8x32xf32>
    tpu.vector_store %arg11[%c4, %c0_36, %c0_37], %119 {strides = array<i32>} : memref<8x8x32xf32, #tpu.memory_space<vmem>>, vector<1x8x32xf32>,
    %c40 = arith.constant 40 : index
    %c0_38 = arith.constant 0 : index
    %120 = vector.load %arg10[%c40, %c0_38] : memref<64x128xf32, #tpu.memory_space<vmem>>, vector<8x128xf32>
    %121 = arith.truncf %116 : vector<8x32xf32> to vector<8x32xbf16>
    %cst_39 = arith.constant dense<0.000000e+00> : vector<8x128xf32>
    %122 = tpu.matmul %121, %7, %cst_39 {dimension_numbers = #tpu.dot_dimension_numbers<[1], [0], [0], [1], [0, 0, 1, 1], [], []>} : vector<8x32xbf16>, vector<32x128xbf16>, vector<8x128xf32> -> vector<8x128xf32>
    %123 = arith.addf %120, %122 : vector<8x128xf32>
    %124 = arith.negf %123 : vector<8x128xf32>
    %125 = math.exp %124 : vector<8x128xf32>
    %cst_40 = arith.constant 1.000000e+00 : f32
    %126 = vector.broadcast %cst_40 : f32 to vector<8x128xf32>
    %127 = arith.addf %126, %125 : vector<8x128xf32>
    %128 = arith.divf %126, %127 : vector<8x128xf32>
    %129 = math.tanh %123 : vector<8x128xf32>
    %130 = vector.extract_strided_slice %128 {offsets = [0, 32], sizes = [8, 32], strides = [1, 1]} : vector<8x128xf32> to vector<8x32xf32>
    %131 = arith.mulf %130, %113 : vector<8x32xf32>
    %132 = vector.extract_strided_slice %128 {offsets = [0, 0], sizes = [8, 32], strides = [1, 1]} : vector<8x128xf32> to vector<8x32xf32>
    %133 = vector.extract_strided_slice %129 {offsets = [0, 64], sizes = [8, 32], strides = [1, 1]} : vector<8x128xf32> to vector<8x32xf32>
    %134 = arith.mulf %132, %133 : vector<8x32xf32>
    %135 = arith.addf %131, %134 : vector<8x32xf32>
    %136 = vector.extract_strided_slice %128 {offsets = [0, 96], sizes = [8, 32], strides = [1, 1]} : vector<8x128xf32> to vector<8x32xf32>
    %137 = math.tanh %135 : vector<8x32xf32>
    %138 = arith.mulf %136, %137 : vector<8x32xf32>
    %c5 = arith.constant 5 : index
    %c0_41 = arith.constant 0 : index
    %c0_42 = arith.constant 0 : index
    %139 = vector.load %arg11[%c5, %c0_41, %c0_42] : memref<8x8x32xf32, #tpu.memory_space<vmem>>, vector<1x8x32xf32>
    %140 = vector.shape_cast %139 : vector<1x8x32xf32> to vector<8x32xf32>
    %141 = vector.shape_cast %138 : vector<8x32xf32> to vector<1x8x32xf32>
    tpu.vector_store %arg11[%c5, %c0_41, %c0_42], %141 {strides = array<i32>} : memref<8x8x32xf32, #tpu.memory_space<vmem>>, vector<1x8x32xf32>,
    %c48 = arith.constant 48 : index
    %c0_43 = arith.constant 0 : index
    %142 = vector.load %arg10[%c48, %c0_43] : memref<64x128xf32, #tpu.memory_space<vmem>>, vector<8x128xf32>
    %143 = arith.truncf %138 : vector<8x32xf32> to vector<8x32xbf16>
    %cst_44 = arith.constant dense<0.000000e+00> : vector<8x128xf32>
    %144 = tpu.matmul %143, %7, %cst_44 {dimension_numbers = #tpu.dot_dimension_numbers<[1], [0], [0], [1], [0, 0, 1, 1], [], []>} : vector<8x32xbf16>, vector<32x128xbf16>, vector<8x128xf32> -> vector<8x128xf32>
    %145 = arith.addf %142, %144 : vector<8x128xf32>
    %146 = arith.negf %145 : vector<8x128xf32>
    %147 = math.exp %146 : vector<8x128xf32>
    %cst_45 = arith.constant 1.000000e+00 : f32
    %148 = vector.broadcast %cst_45 : f32 to vector<8x128xf32>
    %149 = arith.addf %148, %147 : vector<8x128xf32>
    %150 = arith.divf %148, %149 : vector<8x128xf32>
    %151 = math.tanh %145 : vector<8x128xf32>
    %152 = vector.extract_strided_slice %150 {offsets = [0, 32], sizes = [8, 32], strides = [1, 1]} : vector<8x128xf32> to vector<8x32xf32>
    %153 = arith.mulf %152, %135 : vector<8x32xf32>
    %154 = vector.extract_strided_slice %150 {offsets = [0, 0], sizes = [8, 32], strides = [1, 1]} : vector<8x128xf32> to vector<8x32xf32>
    %155 = vector.extract_strided_slice %151 {offsets = [0, 64], sizes = [8, 32], strides = [1, 1]} : vector<8x128xf32> to vector<8x32xf32>
    %156 = arith.mulf %154, %155 : vector<8x32xf32>
    %157 = arith.addf %153, %156 : vector<8x32xf32>
    %158 = vector.extract_strided_slice %150 {offsets = [0, 96], sizes = [8, 32], strides = [1, 1]} : vector<8x128xf32> to vector<8x32xf32>
    %159 = math.tanh %157 : vector<8x32xf32>
    %160 = arith.mulf %158, %159 : vector<8x32xf32>
    %c6 = arith.constant 6 : index
    %c0_46 = arith.constant 0 : index
    %c0_47 = arith.constant 0 : index
    %161 = vector.load %arg11[%c6, %c0_46, %c0_47] : memref<8x8x32xf32, #tpu.memory_space<vmem>>, vector<1x8x32xf32>
    %162 = vector.shape_cast %161 : vector<1x8x32xf32> to vector<8x32xf32>
    %163 = vector.shape_cast %160 : vector<8x32xf32> to vector<1x8x32xf32>
    tpu.vector_store %arg11[%c6, %c0_46, %c0_47], %163 {strides = array<i32>} : memref<8x8x32xf32, #tpu.memory_space<vmem>>, vector<1x8x32xf32>,
    %c56 = arith.constant 56 : index
    %c0_48 = arith.constant 0 : index
    %164 = vector.load %arg10[%c56, %c0_48] : memref<64x128xf32, #tpu.memory_space<vmem>>, vector<8x128xf32>
    %165 = arith.truncf %160 : vector<8x32xf32> to vector<8x32xbf16>
    %cst_49 = arith.constant dense<0.000000e+00> : vector<8x128xf32>
    %166 = tpu.matmul %165, %7, %cst_49 {dimension_numbers = #tpu.dot_dimension_numbers<[1], [0], [0], [1], [0, 0, 1, 1], [], []>} : vector<8x32xbf16>, vector<32x128xbf16>, vector<8x128xf32> -> vector<8x128xf32>
    %167 = arith.addf %164, %166 : vector<8x128xf32>
    %168 = arith.negf %167 : vector<8x128xf32>
    %169 = math.exp %168 : vector<8x128xf32>
    %cst_50 = arith.constant 1.000000e+00 : f32
    %170 = vector.broadcast %cst_50 : f32 to vector<8x128xf32>
    %171 = arith.addf %170, %169 : vector<8x128xf32>
    %172 = arith.divf %170, %171 : vector<8x128xf32>
    %173 = math.tanh %167 : vector<8x128xf32>
    %174 = vector.extract_strided_slice %172 {offsets = [0, 32], sizes = [8, 32], strides = [1, 1]} : vector<8x128xf32> to vector<8x32xf32>
    %175 = arith.mulf %174, %157 : vector<8x32xf32>
    %176 = vector.extract_strided_slice %172 {offsets = [0, 0], sizes = [8, 32], strides = [1, 1]} : vector<8x128xf32> to vector<8x32xf32>
    %177 = vector.extract_strided_slice %173 {offsets = [0, 64], sizes = [8, 32], strides = [1, 1]} : vector<8x128xf32> to vector<8x32xf32>
    %178 = arith.mulf %176, %177 : vector<8x32xf32>
    %179 = arith.addf %175, %178 : vector<8x32xf32>
    %180 = vector.extract_strided_slice %172 {offsets = [0, 96], sizes = [8, 32], strides = [1, 1]} : vector<8x128xf32> to vector<8x32xf32>
    %181 = math.tanh %179 : vector<8x32xf32>
    %182 = arith.mulf %180, %181 : vector<8x32xf32>
    %c7 = arith.constant 7 : index
    %c0_51 = arith.constant 0 : index
    %c0_52 = arith.constant 0 : index
    %183 = vector.load %arg11[%c7, %c0_51, %c0_52] : memref<8x8x32xf32, #tpu.memory_space<vmem>>, vector<1x8x32xf32>
    %184 = vector.shape_cast %183 : vector<1x8x32xf32> to vector<8x32xf32>
    %185 = vector.shape_cast %182 : vector<8x32xf32> to vector<1x8x32xf32>
    tpu.vector_store %arg11[%c7, %c0_51, %c0_52], %185 {strides = array<i32>} : memref<8x8x32xf32, #tpu.memory_space<vmem>>, vector<1x8x32xf32>,
    %c0_53 = arith.constant 0 : index
    %c0_54 = arith.constant 0 : index
    %186 = vector.load %arg2[%c0_53, %c0_54] : memref<8x8xf32, #tpu.memory_space<vmem>>, vector<8x8xf32>
    %187 = vector.extract_strided_slice %186 {offsets = [0, 0], sizes = [8, 1], strides = [1, 1]} : vector<8x8xf32> to vector<8x1xf32>
    %c0_55 = arith.constant 0 : index
    %c0_56 = arith.constant 0 : index
    %c0_57 = arith.constant 0 : index
    %188 = vector.load %arg11[%c0_55, %c0_56, %c0_57] : memref<8x8x32xf32, #tpu.memory_space<vmem>>, vector<1x8x32xf32>
    %189 = vector.shape_cast %188 : vector<1x8x32xf32> to vector<8x32xf32>
    %190 = vector.broadcast %187 : vector<8x1xf32> to vector<8x32xf32>
    %191 = arith.mulf %190, %189 : vector<8x32xf32>
    %192 = vector.extract_strided_slice %186 {offsets = [0, 1], sizes = [8, 1], strides = [1, 1]} : vector<8x8xf32> to vector<8x1xf32>
    %c1_58 = arith.constant 1 : index
    %c0_59 = arith.constant 0 : index
    %c0_60 = arith.constant 0 : index
    %193 = vector.load %arg11[%c1_58, %c0_59, %c0_60] : memref<8x8x32xf32, #tpu.memory_space<vmem>>, vector<1x8x32xf32>
    %194 = vector.shape_cast %193 : vector<1x8x32xf32> to vector<8x32xf32>
    %195 = vector.broadcast %192 : vector<8x1xf32> to vector<8x32xf32>
    %196 = arith.mulf %195, %194 : vector<8x32xf32>
    %197 = arith.addf %191, %196 : vector<8x32xf32>
    %198 = vector.extract_strided_slice %186 {offsets = [0, 2], sizes = [8, 1], strides = [1, 1]} : vector<8x8xf32> to vector<8x1xf32>
    %c2_61 = arith.constant 2 : index
    %c0_62 = arith.constant 0 : index
    %c0_63 = arith.constant 0 : index
    %199 = vector.load %arg11[%c2_61, %c0_62, %c0_63] : memref<8x8x32xf32, #tpu.memory_space<vmem>>, vector<1x8x32xf32>
    %200 = vector.shape_cast %199 : vector<1x8x32xf32> to vector<8x32xf32>
    %201 = vector.broadcast %198 : vector<8x1xf32> to vector<8x32xf32>
    %202 = arith.mulf %201, %200 : vector<8x32xf32>
    %203 = arith.addf %197, %202 : vector<8x32xf32>
    %204 = vector.extract_strided_slice %186 {offsets = [0, 3], sizes = [8, 1], strides = [1, 1]} : vector<8x8xf32> to vector<8x1xf32>
    %c3_64 = arith.constant 3 : index
    %c0_65 = arith.constant 0 : index
    %c0_66 = arith.constant 0 : index
    %205 = vector.load %arg11[%c3_64, %c0_65, %c0_66] : memref<8x8x32xf32, #tpu.memory_space<vmem>>, vector<1x8x32xf32>
    %206 = vector.shape_cast %205 : vector<1x8x32xf32> to vector<8x32xf32>
    %207 = vector.broadcast %204 : vector<8x1xf32> to vector<8x32xf32>
    %208 = arith.mulf %207, %206 : vector<8x32xf32>
    %209 = arith.addf %203, %208 : vector<8x32xf32>
    %210 = vector.extract_strided_slice %186 {offsets = [0, 4], sizes = [8, 1], strides = [1, 1]} : vector<8x8xf32> to vector<8x1xf32>
    %c4_67 = arith.constant 4 : index
    %c0_68 = arith.constant 0 : index
    %c0_69 = arith.constant 0 : index
    %211 = vector.load %arg11[%c4_67, %c0_68, %c0_69] : memref<8x8x32xf32, #tpu.memory_space<vmem>>, vector<1x8x32xf32>
    %212 = vector.shape_cast %211 : vector<1x8x32xf32> to vector<8x32xf32>
    %213 = vector.broadcast %210 : vector<8x1xf32> to vector<8x32xf32>
    %214 = arith.mulf %213, %212 : vector<8x32xf32>
    %215 = arith.addf %209, %214 : vector<8x32xf32>
    %216 = vector.extract_strided_slice %186 {offsets = [0, 5], sizes = [8, 1], strides = [1, 1]} : vector<8x8xf32> to vector<8x1xf32>
    %c5_70 = arith.constant 5 : index
    %c0_71 = arith.constant 0 : index
    %c0_72 = arith.constant 0 : index
    %217 = vector.load %arg11[%c5_70, %c0_71, %c0_72] : memref<8x8x32xf32, #tpu.memory_space<vmem>>, vector<1x8x32xf32>
    %218 = vector.shape_cast %217 : vector<1x8x32xf32> to vector<8x32xf32>
    %219 = vector.broadcast %216 : vector<8x1xf32> to vector<8x32xf32>
    %220 = arith.mulf %219, %218 : vector<8x32xf32>
    %221 = arith.addf %215, %220 : vector<8x32xf32>
    %222 = vector.extract_strided_slice %186 {offsets = [0, 6], sizes = [8, 1], strides = [1, 1]} : vector<8x8xf32> to vector<8x1xf32>
    %c6_73 = arith.constant 6 : index
    %c0_74 = arith.constant 0 : index
    %c0_75 = arith.constant 0 : index
    %223 = vector.load %arg11[%c6_73, %c0_74, %c0_75] : memref<8x8x32xf32, #tpu.memory_space<vmem>>, vector<1x8x32xf32>
    %224 = vector.shape_cast %223 : vector<1x8x32xf32> to vector<8x32xf32>
    %225 = vector.broadcast %222 : vector<8x1xf32> to vector<8x32xf32>
    %226 = arith.mulf %225, %224 : vector<8x32xf32>
    %227 = arith.addf %221, %226 : vector<8x32xf32>
    %228 = vector.extract_strided_slice %186 {offsets = [0, 7], sizes = [8, 1], strides = [1, 1]} : vector<8x8xf32> to vector<8x1xf32>
    %c7_76 = arith.constant 7 : index
    %c0_77 = arith.constant 0 : index
    %c0_78 = arith.constant 0 : index
    %229 = vector.load %arg11[%c7_76, %c0_77, %c0_78] : memref<8x8x32xf32, #tpu.memory_space<vmem>>, vector<1x8x32xf32>
    %230 = vector.shape_cast %229 : vector<1x8x32xf32> to vector<8x32xf32>
    %231 = vector.broadcast %228 : vector<8x1xf32> to vector<8x32xf32>
    %232 = arith.mulf %231, %230 : vector<8x32xf32>
    %233 = arith.addf %227, %232 : vector<8x32xf32>
    %234 = arith.truncf %233 : vector<8x32xf32> to vector<8x32xbf16>
    %c0_79 = arith.constant 0 : index
    %c0_80 = arith.constant 0 : index
    %235 = vector.load %arg6[%c0_79, %c0_80] : memref<32x128xbf16, #tpu.memory_space<vmem>>, vector<32x128xbf16>
    %cst_81 = arith.constant dense<0.000000e+00> : vector<8x128xf32>
    %236 = tpu.matmul %234, %235, %cst_81 {dimension_numbers = #tpu.dot_dimension_numbers<[1], [0], [0], [1], [0, 0, 1, 1], [], []>} : vector<8x32xbf16>, vector<32x128xbf16>, vector<8x128xf32> -> vector<8x128xf32>
    %c0_82 = arith.constant 0 : index
    %c0_83 = arith.constant 0 : index
    %237 = vector.load %arg7[%c0_82, %c0_83] : memref<1x128xf32, #tpu.memory_space<vmem>>, vector<1x128xf32>
    %238 = vector.broadcast %237 : vector<1x128xf32> to vector<8x128xf32>
    %239 = arith.addf %236, %238 : vector<8x128xf32>
    %c0_84 = arith.constant 0 : index
    %c0_85 = arith.constant 0 : index
    %240 = vector.load %arg8[%c0_84, %c0_85] : memref<8x128xf32, #tpu.memory_space<vmem>>, vector<8x128xf32>
    %241 = arith.addf %239, %240 : vector<8x128xf32>
    %c0_86 = arith.constant 0 : index
    %c0_87 = arith.constant 0 : index
    %242 = vector.load %arg9[%c0_86, %c0_87] : memref<8x128xf32, #tpu.memory_space<vmem>>, vector<8x128xf32>
    tpu.vector_store %arg9[%c0_86, %c0_87], %241 {strides = array<i32>} : memref<8x128xf32, #tpu.memory_space<vmem>>, vector<8x128xf32>,
    return
  }
  func.func @transform_0(%arg0: i32) -> (i32, i32) {
    %c0_i32 = arith.constant 0 : i32
    %c0_i32_0 = arith.constant 0 : i32
    return %arg0, %c0_i32 : i32, i32
  }
  func.func @transform_1(%arg0: i32) -> (i32, i32) {
    %c0_i32 = arith.constant 0 : i32
    %c0_i32_0 = arith.constant 0 : i32
    return %arg0, %c0_i32 : i32, i32
  }
  func.func @transform_2(%arg0: i32) -> (i32, i32) {
    %c0_i32 = arith.constant 0 : i32
    %c0_i32_0 = arith.constant 0 : i32
    %c0_i32_1 = arith.constant 0 : i32
    return %c0_i32, %c0_i32_0 : i32, i32
  }
  func.func @transform_3(%arg0: i32) -> (i32, i32) {
    %c0_i32 = arith.constant 0 : i32
    %c0_i32_0 = arith.constant 0 : i32
    %c0_i32_1 = arith.constant 0 : i32
    return %c0_i32, %c0_i32_0 : i32, i32
  }
  func.func @transform_4(%arg0: i32) -> (i32, i32) {
    %c0_i32 = arith.constant 0 : i32
    %c0_i32_0 = arith.constant 0 : i32
    %c0_i32_1 = arith.constant 0 : i32
    return %c0_i32, %c0_i32_0 : i32, i32
  }
  func.func @transform_5(%arg0: i32) -> (i32, i32) {
    %c0_i32 = arith.constant 0 : i32
    %c0_i32_0 = arith.constant 0 : i32
    %c0_i32_1 = arith.constant 0 : i32
    return %c0_i32, %c0_i32_0 : i32, i32
  }
  func.func @transform_6(%arg0: i32) -> (i32, i32) {
    %c0_i32 = arith.constant 0 : i32
    %c0_i32_0 = arith.constant 0 : i32
    %c0_i32_1 = arith.constant 0 : i32
    return %c0_i32, %c0_i32_0 : i32, i32
  }
  func.func @transform_7(%arg0: i32) -> (i32, i32) {
    %c0_i32 = arith.constant 0 : i32
    %c0_i32_0 = arith.constant 0 : i32
    return %arg0, %c0_i32 : i32, i32
  }
  func.func @transform_8(%arg0: i32) -> (i32, i32) {
    %c0_i32 = arith.constant 0 : i32
    %c0_i32_0 = arith.constant 0 : i32
    return %arg0, %c0_i32 : i32, i32
  }
}

</mosaic_0001>

<llo_original>
// kernel: tpu_custom_call.1
$region0: #{tpu_custom_call.1}
  #allocation0 [shape = 'u32[]', space=smem, size = 0x4, offset = 0x4, fixed_abs, tag = 'smem constant byte address 0x4 - core index']
  #allocation1 [shape = 'u32[144,128]{1,0:T(1,128)}', space=vmem, size = 0x12000, scoped, tag = 'internal scratch']
  #allocation2 [shape = 'f32[64,128]{1,0:T(8,128)}', space=vmem, size = 0x8000, scoped, tag = 'scratch operand']
  #allocation3 [shape = 'f32[8,8,32]{2,1,0:T(8,128)}', space=vmem, size = 0x8000, scoped, tag = 'scratch operand']
  %s0 = inlined_call_operand.vmem [shape: bf16[64,32], index: 0, kind: input, shape index: {}]
  %s1 = inlined_call_operand.hbm [shape: f32[8,8], index: 1, kind: input, shape index: {}]
  %s2 = inlined_call_operand.vmem [shape: bf16[32,128], index: 2, kind: input, shape index: {}]
  %s3 = inlined_call_operand.vmem [shape: bf16[32,128], index: 3, kind: input, shape index: {}]
  %s4 = inlined_call_operand.vmem [shape: f32[1,128], index: 4, kind: input, shape index: {}]
  %s5 = inlined_call_operand.vmem [shape: bf16[32,128], index: 5, kind: input, shape index: {}]
  %s6 = inlined_call_operand.vmem [shape: f32[1,128], index: 6, kind: input, shape index: {}]
  %s7 = inlined_call_operand.vmem [shape: f32[8,128], index: 7, kind: input, shape index: {}]
  %s8 = inlined_call_operand.hbm [shape: f32[8,128], index: 8, kind: output, shape index: {}]
  %s9 = sld [smem:[#allocation0]]
  $region46: #{tpu_custom_call.1} parent=0
    _
  %s11 = ssub.s32 1, %s9
  %s12 = scalar_select 0, %s11, %s9
  $region1: #{tpu_custom_call.1} parent=0
    #allocation4 [shape = 'u8[4096]{0}', space=vmem, size = 0x1000, scoped, tag = 'input window, operand 1, single buffered']
    #allocation5 [shape = 's32[1]{0}', space=sflag, size = 0x4, scoped, tag = 'scoped memory for tpu_custom_call.1']
    #allocation6 [shape = 's32[1]{0}', space=sflag, size = 0x4, scoped, tag = 'scoped memory for tpu_custom_call.1']
    #allocation7 [shape = 'u8[4096]{0}', space=vmem, size = 0x1000, scoped, tag = 'output window, operand 0, single buffered']
    %13 = vsyncpa [#allocation5], 0
    %14 = vsyncpa [#allocation6], 0
    // Predicated region
    $region2: #{tpu_custom_call.1} parent=1 // pred_check
      _
    $region3: #{tpu_custom_call.1} parent=1 // pred_check_branch
      %16 = sbr.rel (0) target = $region5
    $region4: #{tpu_custom_call.1} parent=1 // pred_region
      _
    $region5: #{tpu_custom_call.1} parent=1 // pred_fallthru
      _
    // Predicated region
    $region6: #{tpu_custom_call.1} parent=1 // pred_check
      _
    $region7: #{tpu_custom_call.1} parent=1 // pred_check_branch
      %18 = sbr.rel (0) target = $region9
    $region8: #{tpu_custom_call.1} parent=1 // pred_region
      %s20 = ssub.s32 128, 128
      %21 = vsyncadd [#allocation5], %s20
      %s23 = sshll.u32 [#allocation4], 4
      %s24 = int_to_ptr.vmem [resolvable:$true] %s23
      %26 = dma.hbm_to_vmem [thread:$0]  %s1, 128, %s24, [#allocation5]
    $region9: #{tpu_custom_call.1} parent=1 // pred_fallthru
      _
    // Predicated region
    $region10: #{tpu_custom_call.1} parent=1 // pred_check
      _
    $region11: #{tpu_custom_call.1} parent=1 // pred_check_branch
      %28 = sbr.rel (0) target = $region13
    $region12: #{tpu_custom_call.1} parent=1 // pred_region
      _
    $region13: #{tpu_custom_call.1} parent=1 // pred_fallthru
      _
    // Predicated region
    $region14: #{tpu_custom_call.1} parent=1 // pred_check
      _
    $region15: #{tpu_custom_call.1} parent=1 // pred_check_branch
      %30 = sbr.rel (0) target = $region17
    $region16: #{tpu_custom_call.1} parent=1 // pred_region
      _
    $region17: #{tpu_custom_call.1} parent=1 // pred_fallthru
      _
    // Predicated region
    $region18: #{tpu_custom_call.1} parent=1 // pred_check
      _
    $region19: #{tpu_custom_call.1} parent=1 // pred_check_branch
      %32 = sbr.rel (0) target = $region21
    $region20: #{tpu_custom_call.1} parent=1 // pred_region
      _
    $region21: #{tpu_custom_call.1} parent=1 // pred_fallthru
      _
    // Predicated region
    $region22: #{tpu_custom_call.1} parent=1 // pred_check
      _
    $region23: #{tpu_custom_call.1} parent=1 // pred_check_branch
      %34 = sbr.rel (0) target = $region25
    $region24: #{tpu_custom_call.1} parent=1 // pred_region
      _
    $region25: #{tpu_custom_call.1} parent=1 // pred_fallthru
      _
    // Predicated region
    $region26: #{tpu_custom_call.1} parent=1 // pred_check
      _
    $region27: #{tpu_custom_call.1} parent=1 // pred_check_branch
      %36 = sbr.rel (0) target = $region29
    $region28: #{tpu_custom_call.1} parent=1 // pred_region
      _
    $region29: #{tpu_custom_call.1} parent=1 // pred_fallthru
      _
    // Predicated region
    $region30: #{tpu_custom_call.1} parent=1 // pred_check
      _
    $region31: #{tpu_custom_call.1} parent=1 // pred_check_branch
      %38 = sbr.rel (0) target = $region33
    $region32: #{tpu_custom_call.1} parent=1 // pred_region
      _
    $region33: #{tpu_custom_call.1} parent=1 // pred_fallthru
      _
    // Predicated region
    $region34: #{tpu_custom_call.1} parent=1 // pred_check
      _
    $region35: #{tpu_custom_call.1} parent=1 // pred_check_branch
      %40 = sbr.rel (0) target = $region37
    $region36: #{tpu_custom_call.1} parent=1 // pred_region
      %41 = dma.done [#allocation5], 128
    $region37: #{tpu_custom_call.1} parent=1 // pred_fallthru
      _
    %v43 = vld [vmem:[%s0] sm:$0xf]
    %v44 = vld [vmem:[%s0 + $0x4] sm:$0xf]
    %v45 = vld [vmem:[%s0 + $0x8] sm:$0xf]
    %v46 = vld [vmem:[%s0 + $0xc] sm:$0xf]
    %v47 = vld [vmem:[%s0 + $0x10] sm:$0xf]
    %v48 = vld [vmem:[%s0 + $0x14] sm:$0xf]
    %v49 = vld [vmem:[%s0 + $0x18] sm:$0xf]
    %v50 = vld [vmem:[%s0 + $0x1c] sm:$0xf]
    %v51 = vld [vmem:[%s2] sm:$0xf]
    %v52 = vld [vmem:[%s2 + $0x4] sm:$0xf]
    %v53 = vld [vmem:[%s2 + $0x8] sm:$0xf]
    %v54 = vld [vmem:[%s2 + $0xc] sm:$0xf]
    %v55 = vld [vmem:[%s4] sm:$0x1]
    %v57 = vlaneseq
    %v58 = vshrl.u32 %v57, 7
    %v59 = vsub.s32 0, %v58
    %v60 = vrot.slane %v55, %v59
    %v70 = vunpack.c.l.b16 %v43
    %v71 = vunpack.c.l.b16 %v44
    %v72 = vunpack.c.l.b16 %v45
    %v73 = vunpack.c.l.b16 %v46
    %v74 = vunpack.c.l.b16 %v47
    %v75 = vunpack.c.l.b16 %v48
    %v76 = vunpack.c.l.b16 %v49
    %v77 = vunpack.c.l.b16 %v50
    %v78 = vpack.c.b16 %v71, %v70
    %v79 = vpack.c.b16 %v73, %v72
    %v80 = vpack.c.b16 %v75, %v74
    %v81 = vpack.c.b16 %v77, %v76
    %v86 = vunpack.c.l.b16 %v51
    %v87 = vunpack.c.l.b16 %v52
    %v88 = vunpack.c.l.b16 %v53
    %v89 = vunpack.c.l.b16 %v54
    %v90 = vpack.c.b16 %v87, %v86
    %v91 = vpack.c.b16 %v89, %v88
    %vm94 = vcmask 261120
    %v96 = vsel %vm94, %v78, 0
    %v99 = vsel %vm94, %v79, 0
    %v102 = vsel %vm94, %v80, 0
    %v105 = vsel %vm94, %v81, 0
    %107 = vmatprep.subr.bf16.mxu0 0
    %108 = vmatpush1.bf16.msra.mxu0 0
    %109 = vmatprep.subr.bf16.mxu0 0
    %110 = vmatpush1.bf16.msra.mxu0 0
    %111 = vmatprep.subr.bf16.mxu0 0
    %112 = vmatpush1.bf16.msra.mxu0 0
    %113 = vmatprep.subr.bf16.mxu0 0
    %114 = vmatpush1.bf16.msra.mxu0 0
    %115 = vmatprep.subr.bf16.mxu0 0
    %116 = vmatpush1.bf16.msra.mxu0 0
    %117 = vmatprep.subr.bf16.mxu0 0
    %118 = vmatpush1.bf16.msra.mxu0 0
    %119 = vmatprep.subr.bf16.mxu0 0
    %120 = vmatpush1.bf16.msra.mxu0 %v91
    %121 = vmatprep.subr.bf16.mxu0 0
    %122 = vmatpush1.bf16.msra.mxu0 %v90
    %123 = vmatprep.subr.bf16.mxu0 0
    %124 = vmatpush2.bf16.msra.mxu0 0
    %125 = vmatprep.subr.bf16.mxu0 0
    %126 = vmatpush2.bf16.msra.mxu0 0
    %127 = vmatprep.subr.bf16.mxu0 0
    %128 = vmatpush2.bf16.msra.mxu0 0
    %129 = vmatprep.subr.bf16.mxu0 0
    %130 = vmatpush2.bf16.msra.mxu0 0
    %131 = vmatprep.subr.bf16.mxu0 0
    %132 = vmatpush2.bf16.msra.mxu0 0
    %133 = vmatprep.subr.bf16.mxu0 0
    %134 = vmatpush2.bf16.msra.mxu0 0
    %135 = vmatprep.subr.bf16.mxu0 0
    %136 = vmatpush2.bf16.msra.mxu0 0
    %137 = vmatprep.subr.bf16.mxu0 0
    %138 = vmatpush2.bf16.msra.mxu0 0
    %139 = vmatprep.mubr.bf16.mxu0 0
    %140 = vmatmul.mubr.bf16.gmra.mxu0 %v96
    %v141 = vpop.f32.mrf.mxu0
    %v142 = vadd.f32 %v60, %v141
    %v143 = vpop.f32.mrf.mxu0
    %v144 = vpop.f32.mrf.mxu0
    %v145 = vadd.f32 %v60, %v144
    %v146 = vpop.f32.mrf.mxu0
    %147 = vmatprep.mubr.bf16.mxu0 0
    %148 = vmatmul.mubr.bf16.gmra.mxu0 %v99
    %v149 = vpop.f32.mrf.mxu0
    %v150 = vadd.f32 %v60, %v149
    %v151 = vpop.f32.mrf.mxu0
    %v152 = vpop.f32.mrf.mxu0
    %v153 = vadd.f32 %v60, %v152
    %v154 = vpop.f32.mrf.mxu0
    %155 = vmatprep.mubr.bf16.mxu0 0
    %156 = vmatmul.mubr.bf16.gmra.mxu0 %v102
    %v157 = vpop.f32.mrf.mxu0
    %v158 = vadd.f32 %v60, %v157
    %v159 = vpop.f32.mrf.mxu0
    %v160 = vpop.f32.mrf.mxu0
    %v161 = vadd.f32 %v60, %v160
    %v162 = vpop.f32.mrf.mxu0
    %163 = vmatprep.mubr.bf16.mxu0 0
    %164 = vmatmul.mubr.bf16.gmra.mxu0 %v105
    %v165 = vpop.f32.mrf.mxu0
    %v166 = vadd.f32 %v60, %v165
    %v167 = vpop.f32.mrf.mxu0
    %v168 = vpop.f32.mrf.mxu0
    %v169 = vadd.f32 %v60, %v168
    %v170 = vpop.f32.mrf.mxu0
    %171 = vdwg.mxu0
    %172 = vst [vmem:[#allocation2] sm:$0xff] %v142
    %173 = vst [vmem:[#allocation2 + $0x8] sm:$0xff] %v145
    %174 = vst [vmem:[#allocation2 + $0x10] sm:$0xff] %v150
    %175 = vst [vmem:[#allocation2 + $0x18] sm:$0xff] %v153
    %176 = vst [vmem:[#allocation2 + $0x20] sm:$0xff] %v158
    %177 = vst [vmem:[#allocation2 + $0x28] sm:$0xff] %v161
    %178 = vst [vmem:[#allocation2 + $0x30] sm:$0xff] %v166
    %179 = vst [vmem:[#allocation2 + $0x38] sm:$0xff] %v169
    %v180 = vld [vmem:[%s3] sm:$0xf]
    %v181 = vld [vmem:[%s3 + $0x4] sm:$0xf]
    %v182 = vld [vmem:[%s3 + $0x8] sm:$0xf]
    %v183 = vld [vmem:[%s3 + $0xc] sm:$0xf]
    %v184 = vld [vmem:[#allocation2] sm:$0xff]
    %v189 = vunpack.c.l.b16 %v180
    %v190 = vunpack.c.l.b16 %v181
    %v191 = vunpack.c.l.b16 %v182
    %v192 = vunpack.c.l.b16 %v183
    %v193 = vpack.c.b16 %v190, %v189
    %v194 = vpack.c.b16 %v192, %v191
    %v198 = vsel %vm94, 0, 0
    %200 = vmatprep.subr.bf16.mxu0 0
    %201 = vmatpush1.bf16.msra.mxu0 0
    %202 = vmatprep.subr.bf16.mxu0 0
    %203 = vmatpush1.bf16.msra.mxu0 0
    %204 = vmatprep.subr.bf16.mxu0 0
    %205 = vmatpush1.bf16.msra.mxu0 0
    %206 = vmatprep.subr.bf16.mxu0 0
    %207 = vmatpush1.bf16.msra.mxu0 0
    %208 = vmatprep.subr.bf16.mxu0 0
    %209 = vmatpush1.bf16.msra.mxu0 0
    %210 = vmatprep.subr.bf16.mxu0 0
    %211 = vmatpush1.bf16.msra.mxu0 0
    %212 = vmatprep.subr.bf16.mxu0 0
    %213 = vmatpush1.bf16.msra.mxu0 %v194
    %214 = vmatprep.subr.bf16.mxu0 0
    %215 = vmatpush1.bf16.msra.mxu0 %v193
    %216 = vmatprep.subr.bf16.mxu0 0
    %217 = vmatpush2.bf16.msra.mxu0 0
    %218 = vmatprep.subr.bf16.mxu0 0
    %219 = vmatpush2.bf16.msra.mxu0 0
    %220 = vmatprep.subr.bf16.mxu0 0
    %221 = vmatpush2.bf16.msra.mxu0 0
    %222 = vmatprep.subr.bf16.mxu0 0
    %223 = vmatpush2.bf16.msra.mxu0 0
    %224 = vmatprep.subr.bf16.mxu0 0
    %225 = vmatpush2.bf16.msra.mxu0 0
    %226 = vmatprep.subr.bf16.mxu0 0
    %227 = vmatpush2.bf16.msra.mxu0 0
    %228 = vmatprep.subr.bf16.mxu0 0
    %229 = vmatpush2.bf16.msra.mxu0 0
    %230 = vmatprep.subr.bf16.mxu0 0
    %231 = vmatpush2.bf16.msra.mxu0 0
    %232 = vmatprep.mubr.bf16.mxu0 0
    %233 = vmatmul.mubr.bf16.gmra.mxu0 %v198
    %v234 = vpop.f32.mrf.mxu0
    %v235 = vadd.f32 0.0, %v234
    %v236 = vpop.f32.mrf.mxu0
    %v237 = vpop.f32.mrf.mxu0
    %v238 = vpop.f32.mrf.mxu0
    %239 = vdwg.mxu0
    %v240 = vadd.f32 %v184, %v235
    %v241 = vxor.u32 %v240, 2147483648
    %v242 = vmul.f32 %v241, 1.442695
    %v243 = vpow.pop %v242
    %v244 = vadd.f32 %v243, 1.0
    %v245 = vrcp.pop %v244
    %v246 = vmul.f32 1.0, %v245
    %v247 = vtanh.pop %v240
    %v248 = vmul.f32 %v246, 0.0
    %250 = vrot.lane.b32.xlu0 %v247, 64
    %v251 = vpop.permute.xlu0 %250
    %v253 = vmul.f32 %v246, %v251
    %255 = vrot.lane.b32.xlu0 %v253, 32
    %v256 = vpop.permute.xlu0 %255
    %v258 = vadd.f32 %v248, %v256
    %v259 = vtanh.pop %v258
    %261 = vrot.lane.b32.xlu0 %v259, 64
    %v262 = vpop.permute.xlu0 %261
    %v264 = vmul.f32 %v246, %v262
    %266 = vrot.lane.b32.xlu0 %v264, 32
    %v267 = vpop.permute.xlu0 %266
    %269 = vst.msk [vmem:[#allocation3] sm:$0xff] %vm94, %v267
    %v270 = vld [vmem:[#allocation2 + $0x8] sm:$0xff]
    %v271 = vpack.c.bf16 %v264, %v264
    %273 = vrot.lane.b32.xlu0 %v271, 32
    %v274 = vpop.permute.xlu0 %273
    %v276 = vsel %vm94, %v274, 0
    %278 = vmatprep.subr.bf16.mxu0 0
    %279 = vmatpush1.bf16.msra.mxu0 0
    %280 = vmatprep.subr.bf16.mxu0 0
    %281 = vmatpush1.bf16.msra.mxu0 0
    %282 = vmatprep.subr.bf16.mxu0 0
    %283 = vmatpush1.bf16.msra.mxu0 0
    %284 = vmatprep.subr.bf16.mxu0 0
    %285 = vmatpush1.bf16.msra.mxu0 0
    %286 = vmatprep.subr.bf16.mxu0 0
    %287 = vmatpush1.bf16.msra.mxu0 0
    %288 = vmatprep.subr.bf16.mxu0 0
    %289 = vmatpush1.bf16.msra.mxu0 0
    %290 = vmatprep.subr.bf16.mxu0 0
    %291 = vmatpush1.bf16.msra.mxu0 %v194
    %292 = vmatprep.subr.bf16.mxu0 0
    %293 = vmatpush1.bf16.msra.mxu0 %v193
    %294 = vmatprep.subr.bf16.mxu0 0
    %295 = vmatpush2.bf16.msra.mxu0 0
    %296 = vmatprep.subr.bf16.mxu0 0
    %297 = vmatpush2.bf16.msra.mxu0 0
    %298 = vmatprep.subr.bf16.mxu0 0
    %299 = vmatpush2.bf16.msra.mxu0 0
    %300 = vmatprep.subr.bf16.mxu0 0
    %301 = vmatpush2.bf16.msra.mxu0 0
    %302 = vmatprep.subr.bf16.mxu0 0
    %303 = vmatpush2.bf16.msra.mxu0 0
    %304 = vmatprep.subr.bf16.mxu0 0
    %305 = vmatpush2.bf16.msra.mxu0 0
    %306 = vmatprep.subr.bf16.mxu0 0
    %307 = vmatpush2.bf16.msra.mxu0 0
    %308 = vmatprep.subr.bf16.mxu0 0
    %309 = vmatpush2.bf16.msra.mxu0 0
    %310 = vmatprep.mubr.bf16.mxu0 0
    %311 = vmatmul.mubr.bf16.gmra.mxu0 %v276
    %v312 = vpop.f32.mrf.mxu0
    %v313 = vadd.f32 0.0, %v312
    %v314 = vpop.f32.mrf.mxu0
    %v315 = vpop.f32.mrf.mxu0
    %v316 = vpop.f32.mrf.mxu0
    %317 = vdwg.mxu0
    %v318 = vadd.f32 %v270, %v313
    %v319 = vxor.u32 %v318, 2147483648
    %v320 = vmul.f32 %v319, 1.442695
    %v321 = vpow.pop %v320
    %v322 = vadd.f32 %v321, 1.0
    %v323 = vrcp.pop %v322
    %v324 = vmul.f32 1.0, %v323
    %v325 = vtanh.pop %v318
    %v326 = vmul.f32 %v324, %v258
    %328 = vrot.lane.b32.xlu0 %v325, 64
    %v329 = vpop.permute.xlu0 %328
    %v331 = vmul.f32 %v324, %v329
    %333 = vrot.lane.b32.xlu0 %v331, 32
    %v334 = vpop.permute.xlu0 %333
    %v336 = vadd.f32 %v326, %v334
    %v337 = vtanh.pop %v336
    %339 = vrot.lane.b32.xlu0 %v337, 64
    %v340 = vpop.permute.xlu0 %339
    %v342 = vmul.f32 %v324, %v340
    %344 = vrot.lane.b32.xlu0 %v342, 32
    %v345 = vpop.permute.xlu0 %344
    %s347 = scalar_lea.vmem [#allocation3], 8
    %348 = vst.msk [vmem:[%s347] sm:$0xff] %vm94, %v345
    %v349 = vld [vmem:[#allocation2 + $0x10] sm:$0xff]
    %v350 = vpack.c.bf16 %v342, %v342
    %352 = vrot.lane.b32.xlu0 %v350, 32
    %v353 = vpop.permute.xlu0 %352
    %v355 = vsel %vm94, %v353, 0
    %357 = vmatprep.subr.bf16.mxu0 0
    %358 = vmatpush1.bf16.msra.mxu0 0
    %359 = vmatprep.subr.bf16.mxu0 0
    %360 = vmatpush1.bf16.msra.mxu0 0
    %361 = vmatprep.subr.bf16.mxu0 0
    %362 = vmatpush1.bf16.msra.mxu0 0
    %363 = vmatprep.subr.bf16.mxu0 0
    %364 = vmatpush1.bf16.msra.mxu0 0
    %365 = vmatprep.subr.bf16.mxu0 0
    %366 = vmatpush1.bf16.msra.mxu0 0
    %367 = vmatprep.subr.bf16.mxu0 0
    %368 = vmatpush1.bf16.msra.mxu0 0
    %369 = vmatprep.subr.bf16.mxu0 0
    %370 = vmatpush1.bf16.msra.mxu0 %v194
    %371 = vmatprep.subr.bf16.mxu0 0
    %372 = vmatpush1.bf16.msra.mxu0 %v193
    %373 = vmatprep.subr.bf16.mxu0 0
    %374 = vmatpush2.bf16.msra.mxu0 0
    %375 = vmatprep.subr.bf16.mxu0 0
    %376 = vmatpush2.bf16.msra.mxu0 0
    %377 = vmatprep.subr.bf16.mxu0 0
    %378 = vmatpush2.bf16.msra.mxu0 0
    %379 = vmatprep.subr.bf16.mxu0 0
    %380 = vmatpush2.bf16.msra.mxu0 0
    %381 = vmatprep.subr.bf16.mxu0 0
    %382 = vmatpush2.bf16.msra.mxu0 0
    %383 = vmatprep.subr.bf16.mxu0 0
    %384 = vmatpush2.bf16.msra.mxu0 0
    %385 = vmatprep.subr.bf16.mxu0 0
    %386 = vmatpush2.bf16.msra.mxu0 0
    %387 = vmatprep.subr.bf16.mxu0 0
    %388 = vmatpush2.bf16.msra.mxu0 0
    %389 = vmatprep.mubr.bf16.mxu0 0
    %390 = vmatmul.mubr.bf16.gmra.mxu0 %v355
    %v391 = vpop.f32.mrf.mxu0
    %v392 = vadd.f32 0.0, %v391
    %v393 = vpop.f32.mrf.mxu0
    %v394 = vpop.f32.mrf.mxu0
    %v395 = vpop.f32.mrf.mxu0
    %396 = vdwg.mxu0
    %v397 = vadd.f32 %v349, %v392
    %v398 = vxor.u32 %v397, 2147483648
    %v399 = vmul.f32 %v398, 1.442695
    %v400 = vpow.pop %v399
    %v401 = vadd.f32 %v400, 1.0
    %v402 = vrcp.pop %v401
    %v403 = vmul.f32 1.0, %v402
    %v404 = vtanh.pop %v397
    %v405 = vmul.f32 %v403, %v336
    %407 = vrot.lane.b32.xlu0 %v404, 64
    %v408 = vpop.permute.xlu0 %407
    %v410 = vmul.f32 %v403, %v408
    %412 = vrot.lane.b32.xlu0 %v410, 32
    %v413 = vpop.permute.xlu0 %412
    %v415 = vadd.f32 %v405, %v413
    %v416 = vtanh.pop %v415
    %418 = vrot.lane.b32.xlu0 %v416, 64
    %v419 = vpop.permute.xlu0 %418
    %v421 = vmul.f32 %v403, %v419
    %423 = vrot.lane.b32.xlu0 %v421, 32
    %v424 = vpop.permute.xlu0 %423
    %s426 = scalar_lea.vmem [#allocation3], 16
    %427 = vst.msk [vmem:[%s426] sm:$0xff] %vm94, %v424
    %v428 = vld [vmem:[#allocation2 + $0x18] sm:$0xff]
    %v429 = vpack.c.bf16 %v421, %v421
    %431 = vrot.lane.b32.xlu0 %v429, 32
    %v432 = vpop.permute.xlu0 %431
    %v434 = vsel %vm94, %v432, 0
    %436 = vmatprep.subr.bf16.mxu0 0
    %437 = vmatpush1.bf16.msra.mxu0 0
    %438 = vmatprep.subr.bf16.mxu0 0
    %439 = vmatpush1.bf16.msra.mxu0 0
    %440 = vmatprep.subr.bf16.mxu0 0
    %441 = vmatpush1.bf16.msra.mxu0 0
    %442 = vmatprep.subr.bf16.mxu0 0
    %443 = vmatpush1.bf16.msra.mxu0 0
    %444 = vmatprep.subr.bf16.mxu0 0
    %445 = vmatpush1.bf16.msra.mxu0 0
    %446 = vmatprep.subr.bf16.mxu0 0
    %447 = vmatpush1.bf16.msra.mxu0 0
    %448 = vmatprep.subr.bf16.mxu0 0
    %449 = vmatpush1.bf16.msra.mxu0 %v194
    %450 = vmatprep.subr.bf16.mxu0 0
    %451 = vmatpush1.bf16.msra.mxu0 %v193
    %452 = vmatprep.subr.bf16.mxu0 0
    %453 = vmatpush2.bf16.msra.mxu0 0
    %454 = vmatprep.subr.bf16.mxu0 0
    %455 = vmatpush2.bf16.msra.mxu0 0
    %456 = vmatprep.subr.bf16.mxu0 0
    %457 = vmatpush2.bf16.msra.mxu0 0
    %458 = vmatprep.subr.bf16.mxu0 0
    %459 = vmatpush2.bf16.msra.mxu0 0
    %460 = vmatprep.subr.bf16.mxu0 0
    %461 = vmatpush2.bf16.msra.mxu0 0
    %462 = vmatprep.subr.bf16.mxu0 0
    %463 = vmatpush2.bf16.msra.mxu0 0
    %464 = vmatprep.subr.bf16.mxu0 0
    %465 = vmatpush2.bf16.msra.mxu0 0
    %466 = vmatprep.subr.bf16.mxu0 0
    %467 = vmatpush2.bf16.msra.mxu0 0
    %468 = vmatprep.mubr.bf16.mxu0 0
    %469 = vmatmul.mubr.bf16.gmra.mxu0 %v434
    %v470 = vpop.f32.mrf.mxu0
    %v471 = vadd.f32 0.0, %v470
    %v472 = vpop.f32.mrf.mxu0
    %v473 = vpop.f32.mrf.mxu0
    %v474 = vpop.f32.mrf.mxu0
    %475 = vdwg.mxu0
    %v476 = vadd.f32 %v428, %v471
    %v477 = vxor.u32 %v476, 2147483648
    %v478 = vmul.f32 %v477, 1.442695
    %v479 = vpow.pop %v478
    %v480 = vadd.f32 %v479, 1.0
    %v481 = vrcp.pop %v480
    %v482 = vmul.f32 1.0, %v481
    %v483 = vtanh.pop %v476
    %v484 = vmul.f32 %v482, %v415
    %486 = vrot.lane.b32.xlu0 %v483, 64
    %v487 = vpop.permute.xlu0 %486
    %v489 = vmul.f32 %v482, %v487
    %491 = vrot.lane.b32.xlu0 %v489, 32
    %v492 = vpop.permute.xlu0 %491
    %v494 = vadd.f32 %v484, %v492
    %v495 = vtanh.pop %v494
    %497 = vrot.lane.b32.xlu0 %v495, 64
    %v498 = vpop.permute.xlu0 %497
    %v500 = vmul.f32 %v482, %v498
    %502 = vrot.lane.b32.xlu0 %v500, 32
    %v503 = vpop.permute.xlu0 %502
    %s505 = scalar_lea.vmem [#allocation3], 24
    %506 = vst.msk [vmem:[%s505] sm:$0xff] %vm94, %v503
    %v507 = vld [vmem:[#allocation2 + $0x20] sm:$0xff]
    %v508 = vpack.c.bf16 %v500, %v500
    %510 = vrot.lane.b32.xlu0 %v508, 32
    %v511 = vpop.permute.xlu0 %510
    %v513 = vsel %vm94, %v511, 0
    %515 = vmatprep.subr.bf16.mxu0 0
    %516 = vmatpush1.bf16.msra.mxu0 0
    %517 = vmatprep.subr.bf16.mxu0 0
    %518 = vmatpush1.bf16.msra.mxu0 0
    %519 = vmatprep.subr.bf16.mxu0 0
    %520 = vmatpush1.bf16.msra.mxu0 0
    %521 = vmatprep.subr.bf16.mxu0 0
    %522 = vmatpush1.bf16.msra.mxu0 0
    %523 = vmatprep.subr.bf16.mxu0 0
    %524 = vmatpush1.bf16.msra.mxu0 0
    %525 = vmatprep.subr.bf16.mxu0 0
    %526 = vmatpush1.bf16.msra.mxu0 0
    %527 = vmatprep.subr.bf16.mxu0 0
    %528 = vmatpush1.bf16.msra.mxu0 %v194
    %529 = vmatprep.subr.bf16.mxu0 0
    %530 = vmatpush1.bf16.msra.mxu0 %v193
    %531 = vmatprep.subr.bf16.mxu0 0
    %532 = vmatpush2.bf16.msra.mxu0 0
    %533 = vmatprep.subr.bf16.mxu0 0
    %534 = vmatpush2.bf16.msra.mxu0 0
    %535 = vmatprep.subr.bf16.mxu0 0
    %536 = vmatpush2.bf16.msra.mxu0 0
    %537 = vmatprep.subr.bf16.mxu0 0
    %538 = vmatpush2.bf16.msra.mxu0 0
    %539 = vmatprep.subr.bf16.mxu0 0
    %540 = vmatpush2.bf16.msra.mxu0 0
    %541 = vmatprep.subr.bf16.mxu0 0
    %542 = vmatpush2.bf16.msra.mxu0 0
    %543 = vmatprep.subr.bf16.mxu0 0
    %544 = vmatpush2.bf16.msra.mxu0 0
    %545 = vmatprep.subr.bf16.mxu0 0
    %546 = vmatpush2.bf16.msra.mxu0 0
    %547 = vmatprep.mubr.bf16.mxu0 0
    %548 = vmatmul.mubr.bf16.gmra.mxu0 %v513
    %v549 = vpop.f32.mrf.mxu0
    %v550 = vadd.f32 0.0, %v549
    %v551 = vpop.f32.mrf.mxu0
    %v552 = vpop.f32.mrf.mxu0
    %v553 = vpop.f32.mrf.mxu0
    %554 = vdwg.mxu0
    %v555 = vadd.f32 %v507, %v550
    %v556 = vxor.u32 %v555, 2147483648
    %v557 = vmul.f32 %v556, 1.442695
    %v558 = vpow.pop %v557
    %v559 = vadd.f32 %v558, 1.0
    %v560 = vrcp.pop %v559
    %v561 = vmul.f32 1.0, %v560
    %v562 = vtanh.pop %v555
    %v563 = vmul.f32 %v561, %v494
    %565 = vrot.lane.b32.xlu0 %v562, 64
    %v566 = vpop.permute.xlu0 %565
    %v568 = vmul.f32 %v561, %v566
    %570 = vrot.lane.b32.xlu0 %v568, 32
    %v571 = vpop.permute.xlu0 %570
    %v573 = vadd.f32 %v563, %v571
    %v574 = vtanh.pop %v573
    %576 = vrot.lane.b32.xlu0 %v574, 64
    %v577 = vpop.permute.xlu0 %576
    %v579 = vmul.f32 %v561, %v577
    %581 = vrot.lane.b32.xlu0 %v579, 32
    %v582 = vpop.permute.xlu0 %581
    %s584 = scalar_lea.vmem [#allocation3], 32
    %585 = vst.msk [vmem:[%s584] sm:$0xff] %vm94, %v582
    %v586 = vld [vmem:[#allocation2 + $0x28] sm:$0xff]
    %v587 = vpack.c.bf16 %v579, %v579
    %589 = vrot.lane.b32.xlu0 %v587, 32
    %v590 = vpop.permute.xlu0 %589
    %v592 = vsel %vm94, %v590, 0
    %594 = vmatprep.subr.bf16.mxu0 0
    %595 = vmatpush1.bf16.msra.mxu0 0
    %596 = vmatprep.subr.bf16.mxu0 0
    %597 = vmatpush1.bf16.msra.mxu0 0
    %598 = vmatprep.subr.bf16.mxu0 0
    %599 = vmatpush1.bf16.msra.mxu0 0
    %600 = vmatprep.subr.bf16.mxu0 0
    %601 = vmatpush1.bf16.msra.mxu0 0
    %602 = vmatprep.subr.bf16.mxu0 0
    %603 = vmatpush1.bf16.msra.mxu0 0
    %604 = vmatprep.subr.bf16.mxu0 0
    %605 = vmatpush1.bf16.msra.mxu0 0
    %606 = vmatprep.subr.bf16.mxu0 0
    %607 = vmatpush1.bf16.msra.mxu0 %v194
    %608 = vmatprep.subr.bf16.mxu0 0
    %609 = vmatpush1.bf16.msra.mxu0 %v193
    %610 = vmatprep.subr.bf16.mxu0 0
    %611 = vmatpush2.bf16.msra.mxu0 0
    %612 = vmatprep.subr.bf16.mxu0 0
    %613 = vmatpush2.bf16.msra.mxu0 0
    %614 = vmatprep.subr.bf16.mxu0 0
    %615 = vmatpush2.bf16.msra.mxu0 0
    %616 = vmatprep.subr.bf16.mxu0 0
    %617 = vmatpush2.bf16.msra.mxu0 0
    %618 = vmatprep.subr.bf16.mxu0 0
    %619 = vmatpush2.bf16.msra.mxu0 0
    %620 = vmatprep.subr.bf16.mxu0 0
    %621 = vmatpush2.bf16.msra.mxu0 0
    %622 = vmatprep.subr.bf16.mxu0 0
    %623 = vmatpush2.bf16.msra.mxu0 0
    %624 = vmatprep.subr.bf16.mxu0 0
    %625 = vmatpush2.bf16.msra.mxu0 0
    %626 = vmatprep.mubr.bf16.mxu0 0
    %627 = vmatmul.mubr.bf16.gmra.mxu0 %v592
    %v628 = vpop.f32.mrf.mxu0
    %v629 = vadd.f32 0.0, %v628
    %v630 = vpop.f32.mrf.mxu0
    %v631 = vpop.f32.mrf.mxu0
    %v632 = vpop.f32.mrf.mxu0
    %633 = vdwg.mxu0
    %v634 = vadd.f32 %v586, %v629
    %v635 = vxor.u32 %v634, 2147483648
    %v636 = vmul.f32 %v635, 1.442695
    %v637 = vpow.pop %v636
    %v638 = vadd.f32 %v637, 1.0
    %v639 = vrcp.pop %v638
    %v640 = vmul.f32 1.0, %v639
    %v641 = vtanh.pop %v634
    %v642 = vmul.f32 %v640, %v573
    %644 = vrot.lane.b32.xlu0 %v641, 64
    %v645 = vpop.permute.xlu0 %644
    %v647 = vmul.f32 %v640, %v645
    %649 = vrot.lane.b32.xlu0 %v647, 32
    %v650 = vpop.permute.xlu0 %649
    %v652 = vadd.f32 %v642, %v650
    %v653 = vtanh.pop %v652
    %655 = vrot.lane.b32.xlu0 %v653, 64
    %v656 = vpop.permute.xlu0 %655
    %v658 = vmul.f32 %v640, %v656
    %660 = vrot.lane.b32.xlu0 %v658, 32
    %v661 = vpop.permute.xlu0 %660
    %s663 = scalar_lea.vmem [#allocation3], 40
    %664 = vst.msk [vmem:[%s663] sm:$0xff] %vm94, %v661
    %v665 = vld [vmem:[#allocation2 + $0x30] sm:$0xff]
    %v666 = vpack.c.bf16 %v658, %v658
    %668 = vrot.lane.b32.xlu0 %v666, 32
    %v669 = vpop.permute.xlu0 %668
    %v671 = vsel %vm94, %v669, 0
    %673 = vmatprep.subr.bf16.mxu0 0
    %674 = vmatpush1.bf16.msra.mxu0 0
    %675 = vmatprep.subr.bf16.mxu0 0
    %676 = vmatpush1.bf16.msra.mxu0 0
    %677 = vmatprep.subr.bf16.mxu0 0
    %678 = vmatpush1.bf16.msra.mxu0 0
    %679 = vmatprep.subr.bf16.mxu0 0
    %680 = vmatpush1.bf16.msra.mxu0 0
    %681 = vmatprep.subr.bf16.mxu0 0
    %682 = vmatpush1.bf16.msra.mxu0 0
    %683 = vmatprep.subr.bf16.mxu0 0
    %684 = vmatpush1.bf16.msra.mxu0 0
    %685 = vmatprep.subr.bf16.mxu0 0
    %686 = vmatpush1.bf16.msra.mxu0 %v194
    %687 = vmatprep.subr.bf16.mxu0 0
    %688 = vmatpush1.bf16.msra.mxu0 %v193
    %689 = vmatprep.subr.bf16.mxu0 0
    %690 = vmatpush2.bf16.msra.mxu0 0
    %691 = vmatprep.subr.bf16.mxu0 0
    %692 = vmatpush2.bf16.msra.mxu0 0
    %693 = vmatprep.subr.bf16.mxu0 0
    %694 = vmatpush2.bf16.msra.mxu0 0
    %695 = vmatprep.subr.bf16.mxu0 0
    %696 = vmatpush2.bf16.msra.mxu0 0
    %697 = vmatprep.subr.bf16.mxu0 0
    %698 = vmatpush2.bf16.msra.mxu0 0
    %699 = vmatprep.subr.bf16.mxu0 0
    %700 = vmatpush2.bf16.msra.mxu0 0
    %701 = vmatprep.subr.bf16.mxu0 0
    %702 = vmatpush2.bf16.msra.mxu0 0
    %703 = vmatprep.subr.bf16.mxu0 0
    %704 = vmatpush2.bf16.msra.mxu0 0
    %705 = vmatprep.mubr.bf16.mxu0 0
    %706 = vmatmul.mubr.bf16.gmra.mxu0 %v671
    %v707 = vpop.f32.mrf.mxu0
    %v708 = vadd.f32 0.0, %v707
    %v709 = vpop.f32.mrf.mxu0
    %v710 = vpop.f32.mrf.mxu0
    %v711 = vpop.f32.mrf.mxu0
    %712 = vdwg.mxu0
    %v713 = vadd.f32 %v665, %v708
    %v714 = vxor.u32 %v713, 2147483648
    %v715 = vmul.f32 %v714, 1.442695
    %v716 = vpow.pop %v715
    %v717 = vadd.f32 %v716, 1.0
    %v718 = vrcp.pop %v717
    %v719 = vmul.f32 1.0, %v718
    %v720 = vtanh.pop %v713
    %v721 = vmul.f32 %v719, %v652
    %723 = vrot.lane.b32.xlu0 %v720, 64
    %v724 = vpop.permute.xlu0 %723
    %v726 = vmul.f32 %v719, %v724
    %728 = vrot.lane.b32.xlu0 %v726, 32
    %v729 = vpop.permute.xlu0 %728
    %v731 = vadd.f32 %v721, %v729
    %v732 = vtanh.pop %v731
    %734 = vrot.lane.b32.xlu0 %v732, 64
    %v735 = vpop.permute.xlu0 %734
    %v737 = vmul.f32 %v719, %v735
    %739 = vrot.lane.b32.xlu0 %v737, 32
    %v740 = vpop.permute.xlu0 %739
    %s742 = scalar_lea.vmem [#allocation3], 48
    %743 = vst.msk [vmem:[%s742] sm:$0xff] %vm94, %v740
    %v744 = vld [vmem:[#allocation2 + $0x38] sm:$0xff]
    %v745 = vpack.c.bf16 %v737, %v737
    %747 = vrot.lane.b32.xlu0 %v745, 32
    %v748 = vpop.permute.xlu0 %747
    %v750 = vsel %vm94, %v748, 0
    %752 = vmatprep.subr.bf16.mxu0 0
    %753 = vmatpush1.bf16.msra.mxu0 0
    %754 = vmatprep.subr.bf16.mxu0 0
    %755 = vmatpush1.bf16.msra.mxu0 0
    %756 = vmatprep.subr.bf16.mxu0 0
    %757 = vmatpush1.bf16.msra.mxu0 0
    %758 = vmatprep.subr.bf16.mxu0 0
    %759 = vmatpush1.bf16.msra.mxu0 0
    %760 = vmatprep.subr.bf16.mxu0 0
    %761 = vmatpush1.bf16.msra.mxu0 0
    %762 = vmatprep.subr.bf16.mxu0 0
    %763 = vmatpush1.bf16.msra.mxu0 0
    %764 = vmatprep.subr.bf16.mxu0 0
    %765 = vmatpush1.bf16.msra.mxu0 %v194
    %766 = vmatprep.subr.bf16.mxu0 0
    %767 = vmatpush1.bf16.msra.mxu0 %v193
    %768 = vmatprep.subr.bf16.mxu0 0
    %769 = vmatpush2.bf16.msra.mxu0 0
    %770 = vmatprep.subr.bf16.mxu0 0
    %771 = vmatpush2.bf16.msra.mxu0 0
    %772 = vmatprep.subr.bf16.mxu0 0
    %773 = vmatpush2.bf16.msra.mxu0 0
    %774 = vmatprep.subr.bf16.mxu0 0
    %775 = vmatpush2.bf16.msra.mxu0 0
    %776 = vmatprep.subr.bf16.mxu0 0
    %777 = vmatpush2.bf16.msra.mxu0 0
    %778 = vmatprep.subr.bf16.mxu0 0
    %779 = vmatpush2.bf16.msra.mxu0 0
    %780 = vmatprep.subr.bf16.mxu0 0
    %781 = vmatpush2.bf16.msra.mxu0 0
    %782 = vmatprep.subr.bf16.mxu0 0
    %783 = vmatpush2.bf16.msra.mxu0 0
    %784 = vmatprep.mubr.bf16.mxu0 0
    %785 = vmatmul.mubr.bf16.gmra.mxu0 %v750
    %v786 = vpop.f32.mrf.mxu0
    %v787 = vadd.f32 0.0, %v786
    %v788 = vpop.f32.mrf.mxu0
    %v789 = vpop.f32.mrf.mxu0
    %v790 = vpop.f32.mrf.mxu0
    %791 = vdwg.mxu0
    %v792 = vadd.f32 %v744, %v787
    %v793 = vxor.u32 %v792, 2147483648
    %v794 = vmul.f32 %v793, 1.442695
    %v795 = vpow.pop %v794
    %v796 = vadd.f32 %v795, 1.0
    %v797 = vrcp.pop %v796
    %v798 = vmul.f32 1.0, %v797
    %v799 = vtanh.pop %v792
    %v800 = vmul.f32 %v798, %v731
    %802 = vrot.lane.b32.xlu0 %v799, 64
    %v803 = vpop.permute.xlu0 %802
    %v805 = vmul.f32 %v798, %v803
    %807 = vrot.lane.b32.xlu0 %v805, 32
    %v808 = vpop.permute.xlu0 %807
    %v810 = vadd.f32 %v800, %v808
    %v811 = vtanh.pop %v810
    %813 = vrot.lane.b32.xlu0 %v811, 64
    %v814 = vpop.permute.xlu0 %813
    %v816 = vmul.f32 %v798, %v814
    %818 = vrot.lane.b32.xlu0 %v816, 32
    %v819 = vpop.permute.xlu0 %818
    %s821 = scalar_lea.vmem [#allocation3], 56
    %822 = vst.msk [vmem:[%s821] sm:$0xff] %vm94, %v819
    %v823 = vld [vmem:[#allocation4] sm:$0xff]
    %v824 = vld [vmem:[#allocation3] sm:$0xff]
    %826 = vset.pattern.permute.xlu0 0
    %827 = vperm.xlu0 %826, %v823
    %v828 = vpop.permute.xlu0 %827
    %v830 = vmul.f32 %v828, %v824
    %v831 = vld [vmem:[%s347] sm:$0xff]
    %832 = vset.pattern.permute.xlu0 1
    %833 = vperm.xlu0 %832, %v823
    %v834 = vpop.permute.xlu0 %833
    %v836 = vmul.f32 %v834, %v831
    %v837 = vadd.f32 %v830, %v836
    %v838 = vld [vmem:[%s426] sm:$0xff]
    %839 = vset.pattern.permute.xlu0 2
    %840 = vperm.xlu0 %839, %v823
    %v841 = vpop.permute.xlu0 %840
    %v843 = vmul.f32 %v841, %v838
    %v844 = vadd.f32 %v837, %v843
    %v845 = vld [vmem:[%s505] sm:$0xff]
    %846 = vset.pattern.permute.xlu0 3
    %847 = vperm.xlu0 %846, %v823
    %v848 = vpop.permute.xlu0 %847
    %v850 = vmul.f32 %v848, %v845
    %v851 = vadd.f32 %v844, %v850
    %v852 = vld [vmem:[%s584] sm:$0xff]
    %853 = vset.pattern.permute.xlu0 4
    %854 = vperm.xlu0 %853, %v823
    %v855 = vpop.permute.xlu0 %854
    %v857 = vmul.f32 %v855, %v852
    %v858 = vadd.f32 %v851, %v857
    %v859 = vld [vmem:[%s663] sm:$0xff]
    %860 = vset.pattern.permute.xlu0 5
    %861 = vperm.xlu0 %860, %v823
    %v862 = vpop.permute.xlu0 %861
    %v864 = vmul.f32 %v862, %v859
    %v865 = vadd.f32 %v858, %v864
    %v866 = vld [vmem:[%s742] sm:$0xff]
    %867 = vset.pattern.permute.xlu0 6
    %868 = vperm.xlu0 %867, %v823
    %v869 = vpop.permute.xlu0 %868
    %v871 = vmul.f32 %v869, %v866
    %v872 = vadd.f32 %v865, %v871
    %v873 = vld [vmem:[%s821] sm:$0xff]
    %874 = vset.pattern.permute.xlu0 7
    %875 = vperm.xlu0 %874, %v823
    %v876 = vpop.permute.xlu0 %875
    %v878 = vmul.f32 %v876, %v873
    %v879 = vadd.f32 %v872, %v878
    %v880 = vpack.c.bf16 %v879, %v879
    %v881 = vld [vmem:[%s5] sm:$0xf]
    %v882 = vld [vmem:[%s5 + $0x4] sm:$0xf]
    %v883 = vld [vmem:[%s5 + $0x8] sm:$0xf]
    %v884 = vld [vmem:[%s5 + $0xc] sm:$0xf]
    %v885 = vld [vmem:[%s6] sm:$0x1]
    %v887 = vlaneseq
    %v888 = vshrl.u32 %v887, 7
    %v889 = vsub.s32 0, %v888
    %v890 = vrot.slane %v885, %v889
    %v896 = vunpack.c.l.b16 %v881
    %v897 = vunpack.c.l.b16 %v882
    %v898 = vunpack.c.l.b16 %v883
    %v899 = vunpack.c.l.b16 %v884
    %v900 = vpack.c.b16 %v897, %v896
    %v901 = vpack.c.b16 %v899, %v898
    %v905 = vsel %vm94, %v880, 0
    %907 = vmatprep.subr.bf16.mxu0 0
    %908 = vmatpush1.bf16.msra.mxu0 0
    %909 = vmatprep.subr.bf16.mxu0 0
    %910 = vmatpush1.bf16.msra.mxu0 0
    %911 = vmatprep.subr.bf16.mxu0 0
    %912 = vmatpush1.bf16.msra.mxu0 0
    %913 = vmatprep.subr.bf16.mxu0 0
    %914 = vmatpush1.bf16.msra.mxu0 0
    %915 = vmatprep.subr.bf16.mxu0 0
    %916 = vmatpush1.bf16.msra.mxu0 0
    %917 = vmatprep.subr.bf16.mxu0 0
    %918 = vmatpush1.bf16.msra.mxu0 0
    %919 = vmatprep.subr.bf16.mxu0 0
    %920 = vmatpush1.bf16.msra.mxu0 %v901
    %921 = vmatprep.subr.bf16.mxu0 0
    %922 = vmatpush1.bf16.msra.mxu0 %v900
    %923 = vmatprep.subr.bf16.mxu0 0
    %924 = vmatpush2.bf16.msra.mxu0 0
    %925 = vmatprep.subr.bf16.mxu0 0
    %926 = vmatpush2.bf16.msra.mxu0 0
    %927 = vmatprep.subr.bf16.mxu0 0
    %928 = vmatpush2.bf16.msra.mxu0 0
    %929 = vmatprep.subr.bf16.mxu0 0
    %930 = vmatpush2.bf16.msra.mxu0 0
    %931 = vmatprep.subr.bf16.mxu0 0
    %932 = vmatpush2.bf16.msra.mxu0 0
    %933 = vmatprep.subr.bf16.mxu0 0
    %934 = vmatpush2.bf16.msra.mxu0 0
    %935 = vmatprep.subr.bf16.mxu0 0
    %936 = vmatpush2.bf16.msra.mxu0 0
    %937 = vmatprep.subr.bf16.mxu0 0
    %938 = vmatpush2.bf16.msra.mxu0 0
    %939 = vmatprep.mubr.bf16.mxu0 0
    %940 = vmatmul.mubr.bf16.gmra.mxu0 %v905
    %v941 = vpop.f32.mrf.mxu0
    %v942 = vadd.f32 %v890, %v941
    %v943 = vpop.f32.mrf.mxu0
    %v944 = vpop.f32.mrf.mxu0
    %v945 = vpop.f32.mrf.mxu0
    %946 = vdwg.mxu0
    %v947 = vld [vmem:[%s7] sm:$0xff]
    %v948 = vadd.f32 %v942, %v947
    %949 = vst [vmem:[#allocation7] sm:$0xff] %v948
    // Predicated region
    $region38: #{tpu_custom_call.1} parent=1 // pred_check
      _
    $region39: #{tpu_custom_call.1} parent=1 // pred_check_branch
      %951 = sbr.rel (0) target = $region41
    $region40: #{tpu_custom_call.1} parent=1 // pred_region
      %s953 = ssub.s32 128, 128
      %954 = vsyncadd [#allocation6], %s953
      %s956 = sshll.u32 [#allocation7], 4
      %s957 = int_to_ptr.vmem [resolvable:$true] %s956
      %959 = dma.vmem_to_hbm [thread:$0]  %s957, 128, %s8, [#allocation6]
    $region41: #{tpu_custom_call.1} parent=1 // pred_fallthru
      _
    // Predicated region
    $region42: #{tpu_custom_call.1} parent=1 // pred_check
      _
    $region43: #{tpu_custom_call.1} parent=1 // pred_check_branch
      %961 = sbr.rel (0) target = $region45
    $region44: #{tpu_custom_call.1} parent=1 // pred_region
      %962 = dma.done [#allocation6], 128
    $region45: #{tpu_custom_call.1} parent=1 // pred_fallthru
      _
    %963 = vsyncpa [#allocation5], 1
    %964 = vsyncpa [#allocation6], 1

</llo_original>
